<compile_context>
chip_gen: v7x
topology: tpu7x:2x2x1
jax: 0.10.0
libtpu: 0.0.40
codegen_flags: <defaults>
</compile_context>

<pallas_src>
import functools

import jax
import jax.numpy as jnp
from jax import lax
from jax.experimental import pallas as pl
from jax.experimental.pallas import tpu as pltpu

LANE = 128  # TPU lane width


def _round_up(x, m):
    return (x + m - 1) // m * m


# ----------------------------- Pallas kernel ------------------------------- #

def _fused_graphsage_kernel(feat_ref, adj_ref, emb_w_ref, emb_b_ref,
                            w_ref, b_ref, gamma_ref, beta_ref, o_ref,
                            *, n_layers, residual_flags, batch_norm):
    # Row-normalized dense adjacency, bf16, resident in VMEM for all layers.
    adj = adj_ref[...]                                                    # [Np, Np] bf16

    # embedding_h: h = feature @ W_emb + b_emb   (in_feat_dropout = identity in eval)
    h = (jnp.dot(feat_ref[...].astype(jnp.bfloat16), emb_w_ref[...],
                 preferred_element_type=jnp.float32)
         + emb_b_ref[...])                                                # [Np, Dp] f32

    for l in range(n_layers):                                             # static unroll
        h_in = h
        h_bf = h.astype(jnp.bfloat16)

        # Mean neighbor aggregation as a single MXU matmul with A_norm.
        c = jnp.dot(adj, h_bf, preferred_element_type=jnp.float32)        # [Np, Dp] f32

        # Linear(cat([h, c])): one dot with K = 2*Dp (W rows: [self | neighbor]).
        hc = jnp.concatenate([h_bf, c.astype(jnp.bfloat16)], axis=-1)     # [Np, 2Dp] bf16
        z = (jnp.dot(hc, w_ref[l], preferred_element_type=jnp.float32)
             + b_ref[l])                                                  # [Np, Dp] f32

        # F.normalize(z, p=2, dim=1), eps=1e-12  ==  z * rsqrt(max(sum(z^2), 1e-24)).
        # Padded feature columns are exactly zero, so sumsq is unaffected by padding.
        sumsq = jnp.sum(z * z, axis=-1, keepdims=True)
        z = z * lax.rsqrt(jnp.maximum(sumsq, 1e-24))

        # ReLU
        z = jnp.maximum(z, 0.0)

        # BatchNorm1d (eval mode) folded to an affine transform; pad cols stay zero.
        if batch_norm:
            z = z * gamma_ref[l] + beta_ref[l]

        # Residual connection (only when logical d_in == d_out, as in GraphSageLayer).
        if residual_flags[l]:
            z = z + h_in

        h = z

    o_ref[...] = h


# ------------------------------ Model glue --------------------------------- #

def build_mean_adjacency(edge_index, num_nodes, n_pad):
    """Dense row-normalized adjacency A[dst, src] = 1 / max(deg_in(dst), 1),
    zero-padded to (n_pad, n_pad), returned in bfloat16 (MXU input dtype)."""
    del num_nodes  # edges already reference valid node ids < num_nodes <= n_pad
    src = edge_index[0]
    dst = edge_index[1]
    a = jnp.zeros((n_pad, n_pad), jnp.float32).at[dst, src].add(1.0)
    deg = jnp.maximum(jnp.sum(a, axis=1, keepdims=True), 1.0)
    return (a / deg).astype(jnp.bfloat16)


def init_params(key, in_dim, hidden_dim, out_dim, n_layers, *, residual=True):
    """Initialize and pre-pack (pad to 128 lanes, stack layers, fold eval-mode BN)."""
    d_pad = _round_up(max(hidden_dim, out_dim), LANE)
    in_pad = _round_up(in_dim, LANE)
    bn_eps = 1e-5

    key, kw, kb = jax.random.split(key, 3)
    emb_w = 0.1 * jax.random.normal(kw, (in_dim, hidden_dim), jnp.float32)
    emb_b = 0.1 * jax.random.normal(kb, (hidden_dim,), jnp.float32)
    emb_w_p = jnp.zeros((in_pad, d_pad), jnp.float32).at[:in_dim, :hidden_dim].set(emb_w)
    emb_b_p = jnp.zeros((1, d_pad), jnp.float32).at[0, :hidden_dim].set(emb_b)

    dims = [(hidden_dim, hidden_dim)] * (n_layers - 1) + [(hidden_dim, out_dim)]
    w_all, b_all, g_all, be_all, res_flags = [], [], [], [], []
    for (d_in, d_out) in dims:
        key, k1, k2 = jax.random.split(key, 3)
        w = 0.1 * jax.random.normal(k1, (2 * d_in, d_out), jnp.float32)  # Linear(2*d_in, d_out)
        b = 0.1 * jax.random.normal(k2, (d_out,), jnp.float32)
        gamma = jnp.ones((d_out,), jnp.float32)
        beta = jnp.zeros((d_out,), jnp.float32)
        running_mean = jnp.zeros((d_out,), jnp.float32)
        running_var = jnp.ones((d_out,), jnp.float32)
        gamma_eff = gamma / jnp.sqrt(running_var + bn_eps)   # eval-mode BN folded
        beta_eff = beta - running_mean * gamma_eff

        # Stack padded weights so rows [0:Dp) act on h (self) and [Dp:2Dp) on c (neighbor).
        w_p = jnp.zeros((2 * d_pad, d_pad), jnp.float32)
        w_p = w_p.at[:d_in, :d_out].set(w[:d_in])
        w_p = w_p.at[d_pad:d_pad + d_in, :d_out].set(w[d_in:])
        w_all.append(w_p)
        b_all.append(jnp.zeros((1, d_pad), jnp.float32).at[0, :d_out].set(b))
        g_all.append(jnp.zeros((1, d_pad), jnp.float32).at[0, :d_out].set(gamma_eff))
        be_all.append(jnp.zeros((1, d_pad), jnp.float32).at[0, :d_out].set(beta_eff))
        res_flags.append(bool(residual) and (d_in == d_out))

    return {
        "emb_w": emb_w_p.astype(jnp.bfloat16),              # (in_pad, Dp)     bf16
        "emb_b": emb_b_p,                                   # (1, Dp)          f32
        "w_all": jnp.stack(w_all).astype(jnp.bfloat16),     # (L, 2*Dp, Dp)    bf16
        "b_all": jnp.stack(b_all),                          # (L, 1, Dp)       f32
        "gamma_all": jnp.stack(g_all),                      # (L, 1, Dp)       f32
        "beta_all": jnp.stack(be_all),                      # (L, 1, Dp)       f32
        "residual_flags": tuple(res_flags),
        "n_layers": n_layers,
        "d_pad": d_pad,
        "in_pad": in_pad,
        "in_dim": in_dim,
        "hidden_dim": hidden_dim,
        "out_dim": out_dim,
    }


def graphsage_forward_pallas(feature, edge_index, params, *, batch_norm=True):
    n_nodes, in_dim = feature.shape
    assert in_dim == params["in_dim"]
    n_pad = _round_up(max(n_nodes, 1), LANE)
    in_pad = params["in_pad"]
    d_pad = params["d_pad"]
    n_layers = params["n_layers"]

    # Zero-pad features (pad node rows & pad feature columns never touch real outputs).
    feat_p = jnp.zeros((n_pad, in_pad), jnp.float32).at[:n_nodes, :in_dim].set(feature)
    adj_p = build_mean_adjacency(edge_index, n_nodes, n_pad)

    kernel = functools.partial(
        _fused_graphsage_kernel,
        n_layers=n_layers,
        residual_flags=params["residual_flags"],
        batch_norm=batch_norm,
    )

    def full(*shape):
        return pl.BlockSpec(shape, lambda i: (0,) * len(shape))

    out_p = pl.pallas_call(
        kernel,
        grid=(1,),
        out_shape=jax.ShapeDtypeStruct((n_pad, d_pad), jnp.float32),
        in_specs=[
            full(n_pad, in_pad),               # feature
            full(n_pad, n_pad),                # row-normalized adjacency (bf16)
            full(in_pad, d_pad),               # embedding weight (bf16)
            full(1, d_pad),                    # embedding bias
            full(n_layers, 2 * d_pad, d_pad),  # stacked SAGE weights (bf16)
            full(n_layers, 1, d_pad),          # biases
            full(n_layers, 1, d_pad),          # folded BN gamma
            full(n_layers, 1, d_pad),          # folded BN beta
        ],
        out_specs=full(n_pad, d_pad),
        compiler_params=pltpu.CompilerParams(
            dimension_semantics=("arbitrary",),
            vmem_limit_bytes=64 * 1024 * 1024,
        ),
    )(feat_p, adj_p, params["emb_w"], params["emb_b"],
      params["w_all"], params["b_all"], params["gamma_all"], params["beta_all"])

    return out_p[:n_nodes, :params["out_dim"]]


# --------------------------------- Main ------------------------------------ #

if __name__ == "__main__":
    # net_params: in_dim=16, hidden_dim=32, out_dim=32, L=3, mean aggregator,
    #             batch_norm=True, residual=True, dropouts in eval mode.
    IN_DIM, HIDDEN_DIM, OUT_DIM, N_LAYERS = 16, 32, 32, 3
    NUM_NODES, NUM_EDGES = 64, 256

    key = jax.random.PRNGKey(0)
    key, k_feat, k_edge = jax.random.split(key, 3)

    feature = jax.random.normal(k_feat, (NUM_NODES, IN_DIM), jnp.float32)
    edge_index = jax.random.randint(k_edge, (2, NUM_EDGES), 0, NUM_NODES, jnp.int32)

    params = init_params(key, IN_DIM, HIDDEN_DIM, OUT_DIM, N_LAYERS, residual=True)

    out = graphsage_forward_pallas(feature, edge_index, params, batch_norm=True)
    out = jax.block_until_ready(out)
    assert out.shape == (NUM_NODES, OUT_DIM)
    assert bool(jnp.all(jnp.isfinite(out)))
    print("KERNEL_OK")
</pallas_src>

<mosaic_0001>
module attributes {stable_mosaic.version = 11 : i64} {
  func.func @_fused_graphsage_kernel(%arg0: i32, %arg1: memref<128x128xf32, #tpu.memory_space<vmem>>, %arg2: memref<128x128xbf16, #tpu.memory_space<vmem>>, %arg3: memref<128x128xbf16, #tpu.memory_space<vmem>>, %arg4: memref<1x128xf32, #tpu.memory_space<vmem>>, %arg5: memref<3x256x128xbf16, #tpu.memory_space<vmem>>, %arg6: memref<3x1x128xf32, #tpu.memory_space<vmem>>, %arg7: memref<3x1x128xf32, #tpu.memory_space<vmem>>, %arg8: memref<3x1x128xf32, #tpu.memory_space<vmem>>, %arg9: memref<128x128xf32, #tpu.memory_space<vmem>>) attributes {dimension_semantics = [#tpu.dimension_semantics<arbitrary>], iteration_bounds = array<i64: 1>, scalar_prefetch = 0 : i64, scratch_operands = 0 : i64, tpu.core_type = #tpu.core_type<tc>, window_params = [{pipeline_mode = #tpu.pipeline_mode<synchronous>, transform_indices = @transform_0, window_bounds = array<i64: 128, 128>}, {pipeline_mode = #tpu.pipeline_mode<synchronous>, transform_indices = @transform_1, window_bounds = array<i64: 128, 128>}, {pipeline_mode = #tpu.pipeline_mode<synchronous>, transform_indices = @transform_2, window_bounds = array<i64: 128, 128>}, {pipeline_mode = #tpu.pipeline_mode<synchronous>, transform_indices = @transform_3, window_bounds = array<i64: 1, 128>}, {pipeline_mode = #tpu.pipeline_mode<synchronous>, transform_indices = @transform_4, window_bounds = array<i64: 3, 256, 128>}, {pipeline_mode = #tpu.pipeline_mode<synchronous>, transform_indices = @transform_5, window_bounds = array<i64: 3, 1, 128>}, {pipeline_mode = #tpu.pipeline_mode<synchronous>, transform_indices = @transform_6, window_bounds = array<i64: 3, 1, 128>}, {pipeline_mode = #tpu.pipeline_mode<synchronous>, transform_indices = @transform_7, window_bounds = array<i64: 3, 1, 128>}, {pipeline_mode = #tpu.pipeline_mode<synchronous>, transform_indices = @transform_8, window_bounds = array<i64: 128, 128>}]} {
    %c0 = arith.constant 0 : index
    %c0_0 = arith.constant 0 : index
    %0 = vector.load %arg2[%c0, %c0_0] : memref<128x128xbf16, #tpu.memory_space<vmem>>, vector<128x128xbf16>
    %c0_1 = arith.constant 0 : index
    %c0_2 = arith.constant 0 : index
    %1 = vector.load %arg1[%c0_1, %c0_2] : memref<128x128xf32, #tpu.memory_space<vmem>>, vector<128x128xf32>
    %2 = arith.truncf %1 : vector<128x128xf32> to vector<128x128xbf16>
    %c0_3 = arith.constant 0 : index
    %c0_4 = arith.constant 0 : index
    %3 = vector.load %arg3[%c0_3, %c0_4] : memref<128x128xbf16, #tpu.memory_space<vmem>>, vector<128x128xbf16>
    %cst = arith.constant dense<0.000000e+00> : vector<128x128xf32>
    %4 = tpu.matmul %2, %3, %cst {dimension_numbers = #tpu.dot_dimension_numbers<[1], [0], [0], [1], [0, 0, 1, 1], [], []>} : vector<128x128xbf16>, vector<128x128xbf16>, vector<128x128xf32> -> vector<128x128xf32>
    %c0_5 = arith.constant 0 : index
    %c0_6 = arith.constant 0 : index
    %5 = vector.load %arg4[%c0_5, %c0_6] : memref<1x128xf32, #tpu.memory_space<vmem>>, vector<1x128xf32>
    %6 = vector.broadcast %5 : vector<1x128xf32> to vector<128x128xf32>
    %7 = arith.addf %4, %6 : vector<128x128xf32>
    %8 = arith.truncf %7 : vector<128x128xf32> to vector<128x128xbf16>
    %cst_7 = arith.constant dense<0.000000e+00> : vector<128x128xf32>
    %9 = tpu.matmul %0, %8, %cst_7 {dimension_numbers = #tpu.dot_dimension_numbers<[1], [0], [0], [1], [0, 0, 1, 1], [], []>} : vector<128x128xbf16>, vector<128x128xbf16>, vector<128x128xf32> -> vector<128x128xf32>
    %10 = arith.truncf %9 : vector<128x128xf32> to vector<128x128xbf16>
    %11 = tpu.concatenate %8, %10 in 1 : vector<128x128xbf16>, vector<128x128xbf16> -> vector<128x256xbf16>
    %c0_8 = arith.constant 0 : index
    %c0_9 = arith.constant 0 : index
    %c0_10 = arith.constant 0 : index
    %12 = vector.load %arg5[%c0_8, %c0_9, %c0_10] : memref<3x256x128xbf16, #tpu.memory_space<vmem>>, vector<1x256x128xbf16>
    %13 = vector.shape_cast %12 : vector<1x256x128xbf16> to vector<256x128xbf16>
    %cst_11 = arith.constant dense<0.000000e+00> : vector<128x128xf32>
    %14 = tpu.matmul %11, %13, %cst_11 {dimension_numbers = #tpu.dot_dimension_numbers<[1], [0], [0], [1], [0, 0, 1, 1], [], []>} : vector<128x256xbf16>, vector<256x128xbf16>, vector<128x128xf32> -> vector<128x128xf32>
    %c0_12 = arith.constant 0 : index
    %c0_13 = arith.constant 0 : index
    %c0_14 = arith.constant 0 : index
    %15 = vector.load %arg6[%c0_12, %c0_13, %c0_14] : memref<3x1x128xf32, #tpu.memory_space<vmem>>, vector<1x1x128xf32>
    %16 = vector.shape_cast %15 : vector<1x1x128xf32> to vector<1x128xf32>
    %17 = vector.broadcast %16 : vector<1x128xf32> to vector<128x128xf32>
    %18 = arith.addf %14, %17 : vector<128x128xf32>
    %19 = arith.mulf %18, %18 : vector<128x128xf32>
    %cst_15 = arith.constant dense<0.000000e+00> : vector<128xf32>
    %20 = vector.multi_reduction <add>, %19, %cst_15 [1] : vector<128x128xf32> to vector<128xf32>
    %21 = vector.shape_cast %20 : vector<128xf32> to vector<128x1xf32>
    %cst_16 = arith.constant 1.000000e-24 : f32
    %22 = vector.broadcast %cst_16 : f32 to vector<128x1xf32>
    %23 = arith.maximumf %21, %22 : vector<128x1xf32>
    %24 = math.rsqrt %23 : vector<128x1xf32>
    %25 = vector.broadcast %24 : vector<128x1xf32> to vector<128x128xf32>
    %26 = arith.mulf %18, %25 : vector<128x128xf32>
    %cst_17 = arith.constant 0.000000e+00 : f32
    %27 = vector.broadcast %cst_17 : f32 to vector<128x128xf32>
    %28 = arith.maximumf %26, %27 : vector<128x128xf32>
    %c0_18 = arith.constant 0 : index
    %c0_19 = arith.constant 0 : index
    %c0_20 = arith.constant 0 : index
    %29 = vector.load %arg7[%c0_18, %c0_19, %c0_20] : memref<3x1x128xf32, #tpu.memory_space<vmem>>, vector<1x1x128xf32>
    %30 = vector.shape_cast %29 : vector<1x1x128xf32> to vector<1x128xf32>
    %31 = vector.broadcast %30 : vector<1x128xf32> to vector<128x128xf32>
    %32 = arith.mulf %28, %31 : vector<128x128xf32>
    %c0_21 = arith.constant 0 : index
    %c0_22 = arith.constant 0 : index
    %c0_23 = arith.constant 0 : index
    %33 = vector.load %arg8[%c0_21, %c0_22, %c0_23] : memref<3x1x128xf32, #tpu.memory_space<vmem>>, vector<1x1x128xf32>
    %34 = vector.shape_cast %33 : vector<1x1x128xf32> to vector<1x128xf32>
    %35 = vector.broadcast %34 : vector<1x128xf32> to vector<128x128xf32>
    %36 = arith.addf %32, %35 : vector<128x128xf32>
    %37 = arith.addf %36, %7 : vector<128x128xf32>
    %38 = arith.truncf %37 : vector<128x128xf32> to vector<128x128xbf16>
    %cst_24 = arith.constant dense<0.000000e+00> : vector<128x128xf32>
    %39 = tpu.matmul %0, %38, %cst_24 {dimension_numbers = #tpu.dot_dimension_numbers<[1], [0], [0], [1], [0, 0, 1, 1], [], []>} : vector<128x128xbf16>, vector<128x128xbf16>, vector<128x128xf32> -> vector<128x128xf32>
    %40 = arith.truncf %39 : vector<128x128xf32> to vector<128x128xbf16>
    %41 = tpu.concatenate %38, %40 in 1 : vector<128x128xbf16>, vector<128x128xbf16> -> vector<128x256xbf16>
    %c1 = arith.constant 1 : index
    %c0_25 = arith.constant 0 : index
    %c0_26 = arith.constant 0 : index
    %42 = vector.load %arg5[%c1, %c0_25, %c0_26] : memref<3x256x128xbf16, #tpu.memory_space<vmem>>, vector<1x256x128xbf16>
    %43 = vector.shape_cast %42 : vector<1x256x128xbf16> to vector<256x128xbf16>
    %cst_27 = arith.constant dense<0.000000e+00> : vector<128x128xf32>
    %44 = tpu.matmul %41, %43, %cst_27 {dimension_numbers = #tpu.dot_dimension_numbers<[1], [0], [0], [1], [0, 0, 1, 1], [], []>} : vector<128x256xbf16>, vector<256x128xbf16>, vector<128x128xf32> -> vector<128x128xf32>
    %c1_28 = arith.constant 1 : index
    %c0_29 = arith.constant 0 : index
    %c0_30 = arith.constant 0 : index
    %45 = vector.load %arg6[%c1_28, %c0_29, %c0_30] : memref<3x1x128xf32, #tpu.memory_space<vmem>>, vector<1x1x128xf32>
    %46 = vector.shape_cast %45 : vector<1x1x128xf32> to vector<1x128xf32>
    %47 = vector.broadcast %46 : vector<1x128xf32> to vector<128x128xf32>
    %48 = arith.addf %44, %47 : vector<128x128xf32>
    %49 = arith.mulf %48, %48 : vector<128x128xf32>
    %cst_31 = arith.constant dense<0.000000e+00> : vector<128xf32>
    %50 = vector.multi_reduction <add>, %49, %cst_31 [1] : vector<128x128xf32> to vector<128xf32>
    %51 = vector.shape_cast %50 : vector<128xf32> to vector<128x1xf32>
    %cst_32 = arith.constant 1.000000e-24 : f32
    %52 = vector.broadcast %cst_32 : f32 to vector<128x1xf32>
    %53 = arith.maximumf %51, %52 : vector<128x1xf32>
    %54 = math.rsqrt %53 : vector<128x1xf32>
    %55 = vector.broadcast %54 : vector<128x1xf32> to vector<128x128xf32>
    %56 = arith.mulf %48, %55 : vector<128x128xf32>
    %cst_33 = arith.constant 0.000000e+00 : f32
    %57 = vector.broadcast %cst_33 : f32 to vector<128x128xf32>
    %58 = arith.maximumf %56, %57 : vector<128x128xf32>
    %c1_34 = arith.constant 1 : index
    %c0_35 = arith.constant 0 : index
    %c0_36 = arith.constant 0 : index
    %59 = vector.load %arg7[%c1_34, %c0_35, %c0_36] : memref<3x1x128xf32, #tpu.memory_space<vmem>>, vector<1x1x128xf32>
    %60 = vector.shape_cast %59 : vector<1x1x128xf32> to vector<1x128xf32>
    %61 = vector.broadcast %60 : vector<1x128xf32> to vector<128x128xf32>
    %62 = arith.mulf %58, %61 : vector<128x128xf32>
    %c1_37 = arith.constant 1 : index
    %c0_38 = arith.constant 0 : index
    %c0_39 = arith.constant 0 : index
    %63 = vector.load %arg8[%c1_37, %c0_38, %c0_39] : memref<3x1x128xf32, #tpu.memory_space<vmem>>, vector<1x1x128xf32>
    %64 = vector.shape_cast %63 : vector<1x1x128xf32> to vector<1x128xf32>
    %65 = vector.broadcast %64 : vector<1x128xf32> to vector<128x128xf32>
    %66 = arith.addf %62, %65 : vector<128x128xf32>
    %67 = arith.addf %66, %37 : vector<128x128xf32>
    %68 = arith.truncf %67 : vector<128x128xf32> to vector<128x128xbf16>
    %cst_40 = arith.constant dense<0.000000e+00> : vector<128x128xf32>
    %69 = tpu.matmul %0, %68, %cst_40 {dimension_numbers = #tpu.dot_dimension_numbers<[1], [0], [0], [1], [0, 0, 1, 1], [], []>} : vector<128x128xbf16>, vector<128x128xbf16>, vector<128x128xf32> -> vector<128x128xf32>
    %70 = arith.truncf %69 : vector<128x128xf32> to vector<128x128xbf16>
    %71 = tpu.concatenate %68, %70 in 1 : vector<128x128xbf16>, vector<128x128xbf16> -> vector<128x256xbf16>
    %c2 = arith.constant 2 : index
    %c0_41 = arith.constant 0 : index
    %c0_42 = arith.constant 0 : index
    %72 = vector.load %arg5[%c2, %c0_41, %c0_42] : memref<3x256x128xbf16, #tpu.memory_space<vmem>>, vector<1x256x128xbf16>
    %73 = vector.shape_cast %72 : vector<1x256x128xbf16> to vector<256x128xbf16>
    %cst_43 = arith.constant dense<0.000000e+00> : vector<128x128xf32>
    %74 = tpu.matmul %71, %73, %cst_43 {dimension_numbers = #tpu.dot_dimension_numbers<[1], [0], [0], [1], [0, 0, 1, 1], [], []>} : vector<128x256xbf16>, vector<256x128xbf16>, vector<128x128xf32> -> vector<128x128xf32>
    %c2_44 = arith.constant 2 : index
    %c0_45 = arith.constant 0 : index
    %c0_46 = arith.constant 0 : index
    %75 = vector.load %arg6[%c2_44, %c0_45, %c0_46] : memref<3x1x128xf32, #tpu.memory_space<vmem>>, vector<1x1x128xf32>
    %76 = vector.shape_cast %75 : vector<1x1x128xf32> to vector<1x128xf32>
    %77 = vector.broadcast %76 : vector<1x128xf32> to vector<128x128xf32>
    %78 = arith.addf %74, %77 : vector<128x128xf32>
    %79 = arith.mulf %78, %78 : vector<128x128xf32>
    %cst_47 = arith.constant dense<0.000000e+00> : vector<128xf32>
    %80 = vector.multi_reduction <add>, %79, %cst_47 [1] : vector<128x128xf32> to vector<128xf32>
    %81 = vector.shape_cast %80 : vector<128xf32> to vector<128x1xf32>
    %cst_48 = arith.constant 1.000000e-24 : f32
    %82 = vector.broadcast %cst_48 : f32 to vector<128x1xf32>
    %83 = arith.maximumf %81, %82 : vector<128x1xf32>
    %84 = math.rsqrt %83 : vector<128x1xf32>
    %85 = vector.broadcast %84 : vector<128x1xf32> to vector<128x128xf32>
    %86 = arith.mulf %78, %85 : vector<128x128xf32>
    %cst_49 = arith.constant 0.000000e+00 : f32
    %87 = vector.broadcast %cst_49 : f32 to vector<128x128xf32>
    %88 = arith.maximumf %86, %87 : vector<128x128xf32>
    %c2_50 = arith.constant 2 : index
    %c0_51 = arith.constant 0 : index
    %c0_52 = arith.constant 0 : index
    %89 = vector.load %arg7[%c2_50, %c0_51, %c0_52] : memref<3x1x128xf32, #tpu.memory_space<vmem>>, vector<1x1x128xf32>
    %90 = vector.shape_cast %89 : vector<1x1x128xf32> to vector<1x128xf32>
    %91 = vector.broadcast %90 : vector<1x128xf32> to vector<128x128xf32>
    %92 = arith.mulf %88, %91 : vector<128x128xf32>
    %c2_53 = arith.constant 2 : index
    %c0_54 = arith.constant 0 : index
    %c0_55 = arith.constant 0 : index
    %93 = vector.load %arg8[%c2_53, %c0_54, %c0_55] : memref<3x1x128xf32, #tpu.memory_space<vmem>>, vector<1x1x128xf32>
    %94 = vector.shape_cast %93 : vector<1x1x128xf32> to vector<1x128xf32>
    %95 = vector.broadcast %94 : vector<1x128xf32> to vector<128x128xf32>
    %96 = arith.addf %92, %95 : vector<128x128xf32>
    %97 = arith.addf %96, %67 : vector<128x128xf32>
    %c0_56 = arith.constant 0 : index
    %c0_57 = arith.constant 0 : index
    %98 = vector.load %arg9[%c0_56, %c0_57] : memref<128x128xf32, #tpu.memory_space<vmem>>, vector<128x128xf32>
    tpu.vector_store %arg9[%c0_56, %c0_57], %97 {strides = array<i32>} : memref<128x128xf32, #tpu.memory_space<vmem>>, vector<128x128xf32>,
    return
  }
  func.func @transform_0(%arg0: i32) -> (i32, i32) {
    %c0_i32 = arith.constant 0 : i32
    %c0_i32_0 = arith.constant 0 : i32
    %c0_i32_1 = arith.constant 0 : i32
    return %c0_i32, %c0_i32_0 : i32, i32
  }
  func.func @transform_1(%arg0: i32) -> (i32, i32) {
    %c0_i32 = arith.constant 0 : i32
    %c0_i32_0 = arith.constant 0 : i32
    %c0_i32_1 = arith.constant 0 : i32
    return %c0_i32, %c0_i32_0 : i32, i32
  }
  func.func @transform_2(%arg0: i32) -> (i32, i32) {
    %c0_i32 = arith.constant 0 : i32
    %c0_i32_0 = arith.constant 0 : i32
    %c0_i32_1 = arith.constant 0 : i32
    return %c0_i32, %c0_i32_0 : i32, i32
  }
  func.func @transform_3(%arg0: i32) -> (i32, i32) {
    %c0_i32 = arith.constant 0 : i32
    %c0_i32_0 = arith.constant 0 : i32
    %c0_i32_1 = arith.constant 0 : i32
    return %c0_i32, %c0_i32_0 : i32, i32
  }
  func.func @transform_4(%arg0: i32) -> (i32, i32, i32) {
    %c0_i32 = arith.constant 0 : i32
    %c0_i32_0 = arith.constant 0 : i32
    %c0_i32_1 = arith.constant 0 : i32
    %c0_i32_2 = arith.constant 0 : i32
    return %c0_i32, %c0_i32_0, %c0_i32_1 : i32, i32, i32
  }
  func.func @transform_5(%arg0: i32) -> (i32, i32, i32) {
    %c0_i32 = arith.constant 0 : i32
    %c0_i32_0 = arith.constant 0 : i32
    %c0_i32_1 = arith.constant 0 : i32
    %c0_i32_2 = arith.constant 0 : i32
    return %c0_i32, %c0_i32_0, %c0_i32_1 : i32, i32, i32
  }
  func.func @transform_6(%arg0: i32) -> (i32, i32, i32) {
    %c0_i32 = arith.constant 0 : i32
    %c0_i32_0 = arith.constant 0 : i32
    %c0_i32_1 = arith.constant 0 : i32
    %c0_i32_2 = arith.constant 0 : i32
    return %c0_i32, %c0_i32_0, %c0_i32_1 : i32, i32, i32
  }
  func.func @transform_7(%arg0: i32) -> (i32, i32, i32) {
    %c0_i32 = arith.constant 0 : i32
    %c0_i32_0 = arith.constant 0 : i32
    %c0_i32_1 = arith.constant 0 : i32
    %c0_i32_2 = arith.constant 0 : i32
    return %c0_i32, %c0_i32_0, %c0_i32_1 : i32, i32, i32
  }
  func.func @transform_8(%arg0: i32) -> (i32, i32) {
    %c0_i32 = arith.constant 0 : i32
    %c0_i32_0 = arith.constant 0 : i32
    %c0_i32_1 = arith.constant 0 : i32
    return %c0_i32, %c0_i32_0 : i32, i32
  }
}

</mosaic_0001>

<llo_original>
// kernel: tpu_custom_call.1
$region0: #{tpu_custom_call.1}
  #allocation0 [shape = 'u32[]', space=smem, size = 0x4, offset = 0x4, fixed_abs, tag = 'smem constant byte address 0x4 - core index']
  #allocation1 [shape = 'u32[144,128]{1,0:T(1,128)}', space=vmem, size = 0x12000, scoped, tag = 'internal scratch']
  %s0 = inlined_call_operand.hbm [shape: f32[128,128], index: 0, kind: input, shape index: {}]
  %s1 = inlined_call_operand.hbm [shape: bf16[128,128], index: 1, kind: input, shape index: {}]
  %s2 = inlined_call_operand.hbm [shape: bf16[128,128], index: 2, kind: input, shape index: {}]
  %s3 = inlined_call_operand.hbm [shape: f32[1,128], index: 3, kind: input, shape index: {}]
  %s4 = inlined_call_operand.hbm [shape: bf16[3,256,128], index: 4, kind: input, shape index: {}]
  %s5 = inlined_call_operand.hbm [shape: f32[3,1,128], index: 5, kind: input, shape index: {}]
  %s6 = inlined_call_operand.hbm [shape: f32[3,1,128], index: 6, kind: input, shape index: {}]
  %s7 = inlined_call_operand.hbm [shape: f32[3,1,128], index: 7, kind: input, shape index: {}]
  %s8 = inlined_call_operand.hbm [shape: f32[128,128], index: 8, kind: output, shape index: {}]
  %s9 = sld [smem:[#allocation0]]
  $region74: #{tpu_custom_call.1} parent=0
    _
  %s11 = ssub.s32 1, %s9
  %s12 = scalar_select 0, %s11, %s9
  $region1: #{tpu_custom_call.1} parent=0
    #allocation2 [shape = 'u8[65536]{0}', space=vmem, size = 0x10000, scoped, tag = 'input window, operand 0, single buffered']
    #allocation3 [shape = 's32[1]{0}', space=sflag, size = 0x4, scoped, tag = 'scoped memory for tpu_custom_call.1']
    #allocation4 [shape = 's32[1]{0}', space=sflag, size = 0x4, scoped, tag = 'scoped memory for tpu_custom_call.1']
    #allocation5 [shape = 'u8[32768]{0}', space=vmem, size = 0x8000, scoped, tag = 'input window, operand 1, single buffered']
    #allocation6 [shape = 's32[1]{0}', space=sflag, size = 0x4, scoped, tag = 'scoped memory for tpu_custom_call.1']
    #allocation7 [shape = 'u8[32768]{0}', space=vmem, size = 0x8000, scoped, tag = 'input window, operand 2, single buffered']
    #allocation8 [shape = 'u8[512]{0}', space=vmem, size = 0x400, scoped, tag = 'input window, operand 3, single buffered']
    #allocation9 [shape = 's32[1]{0}', space=sflag, size = 0x4, scoped, tag = 'scoped memory for tpu_custom_call.1']
    #allocation10 [shape = 'u8[196608]{0}', space=vmem, size = 0x30000, scoped, tag = 'input window, operand 4, single buffered']
    #allocation11 [shape = 'u8[1536]{0}', space=vmem, size = 0x800, scoped, tag = 'input window, operand 5, single buffered']
    #allocation12 [shape = 's32[1]{0}', space=sflag, size = 0x4, scoped, tag = 'scoped memory for tpu_custom_call.1']
    #allocation13 [shape = 'u8[1536]{0}', space=vmem, size = 0x800, scoped, tag = 'input window, operand 6, single buffered']
    #allocation14 [shape = 'u8[1536]{0}', space=vmem, size = 0x800, scoped, tag = 'input window, operand 7, single buffered']
    #allocation15 [shape = 's32[1]{0}', space=sflag, size = 0x4, scoped, tag = 'scoped memory for tpu_custom_call.1']
    #allocation16 [shape = 'u8[65536]{0}', space=vmem, size = 0x10000, scoped, tag = 'output window, operand 0, single buffered']
    %13 = vsyncpa [#allocation3], 0
    %14 = vsyncpa [#allocation6], 0
    %15 = vsyncpa [#allocation9], 0
    %16 = vsyncpa [#allocation12], 0
    %17 = vsyncpa [#allocation15], 0
    %18 = vsyncpa [#allocation4], 0
    // Predicated region
    $region2: #{tpu_custom_call.1} parent=1 // pred_check
      _
    $region3: #{tpu_custom_call.1} parent=1 // pred_check_branch
      %20 = sbr.rel (0) target = $region5
    $region4: #{tpu_custom_call.1} parent=1 // pred_region
      %s22 = ssub.s32 2048, 2048
      %23 = vsyncadd [#allocation3], %s22
      %s24 = sshll.u32 [#allocation2], 4
      %s25 = int_to_ptr.vmem [resolvable:$true] %s24
      %30 = dma.hbm_to_vmem [thread:$0]  %s0, 2048, %s25, [#allocation3], 128, 128, 8
    $region5: #{tpu_custom_call.1} parent=1 // pred_fallthru
      _
    // Predicated region
    $region6: #{tpu_custom_call.1} parent=1 // pred_check
      _
    $region7: #{tpu_custom_call.1} parent=1 // pred_check_branch
      %32 = sbr.rel (0) target = $region9
    $region8: #{tpu_custom_call.1} parent=1 // pred_region
      %s34 = ssub.s32 1024, 1024
      %35 = vsyncadd [#allocation6], %s34
      %s36 = sshll.u32 [#allocation5], 4
      %s37 = int_to_ptr.vmem [resolvable:$true] %s36
      %42 = dma.hbm_to_vmem [thread:$0]  %s1, 1024, %s37, [#allocation6], 64, 64, 4
    $region9: #{tpu_custom_call.1} parent=1 // pred_fallthru
      _
    // Predicated region
    $region10: #{tpu_custom_call.1} parent=1 // pred_check
      _
    $region11: #{tpu_custom_call.1} parent=1 // pred_check_branch
      %44 = sbr.rel (0) target = $region13
    $region12: #{tpu_custom_call.1} parent=1 // pred_region
      %s46 = ssub.s32 1024, 1024
      %47 = vsyncadd [#allocation6], %s46
      %s48 = sshll.u32 [#allocation7], 4
      %s49 = int_to_ptr.vmem [resolvable:$true] %s48
      %54 = dma.hbm_to_vmem [thread:$0]  %s2, 1024, %s49, [#allocation6], 64, 64, 4
    $region13: #{tpu_custom_call.1} parent=1 // pred_fallthru
      _
    // Predicated region
    $region14: #{tpu_custom_call.1} parent=1 // pred_check
      _
    $region15: #{tpu_custom_call.1} parent=1 // pred_check_branch
      %56 = sbr.rel (0) target = $region17
    $region16: #{tpu_custom_call.1} parent=1 // pred_region
      %s58 = ssub.s32 16, 16
      %59 = vsyncadd [#allocation9], %s58
      %s61 = sshll.u32 [#allocation8], 4
      %s62 = int_to_ptr.vmem [resolvable:$true] %s61
      %64 = dma.hbm_to_vmem [thread:$0]  %s3, 16, %s62, [#allocation9]
    $region17: #{tpu_custom_call.1} parent=1 // pred_fallthru
      _
    // Predicated region
    $region18: #{tpu_custom_call.1} parent=1 // pred_check
      _
    $region19: #{tpu_custom_call.1} parent=1 // pred_check_branch
      %66 = sbr.rel (0) target = $region21
    $region20: #{tpu_custom_call.1} parent=1 // pred_region
      %s68 = ssub.s32 6144, 6144
      %69 = vsyncadd [#allocation9], %s68
      %s70 = sshll.u32 [#allocation10], 4
      %s71 = int_to_ptr.vmem [resolvable:$true] %s70
      %76 = dma.hbm_to_vmem [thread:$0]  %s4, 6144, %s71, [#allocation9], 64, 64, 4
    $region21: #{tpu_custom_call.1} parent=1 // pred_fallthru
      _
    // Predicated region
    $region22: #{tpu_custom_call.1} parent=1 // pred_check
      _
    $region23: #{tpu_custom_call.1} parent=1 // pred_check_branch
      %78 = sbr.rel (0) target = $region25
    $region24: #{tpu_custom_call.1} parent=1 // pred_region
      %s80 = ssub.s32 48, 48
      %81 = vsyncadd [#allocation12], %s80
      %s82 = sshll.u32 [#allocation11], 4
      %s83 = int_to_ptr.vmem [resolvable:$true] %s82
      %88 = dma.hbm_to_vmem [thread:$0]  %s5, 48, %s83, [#allocation12], 16, 16, 1
    $region25: #{tpu_custom_call.1} parent=1 // pred_fallthru
      _
    // Predicated region
    $region26: #{tpu_custom_call.1} parent=1 // pred_check
      _
    $region27: #{tpu_custom_call.1} parent=1 // pred_check_branch
      %90 = sbr.rel (0) target = $region29
    $region28: #{tpu_custom_call.1} parent=1 // pred_region
      %s92 = ssub.s32 48, 48
      %93 = vsyncadd [#allocation12], %s92
      %s94 = sshll.u32 [#allocation13], 4
      %s95 = int_to_ptr.vmem [resolvable:$true] %s94
      %100 = dma.hbm_to_vmem [thread:$0]  %s6, 48, %s95, [#allocation12], 16, 16, 1
    $region29: #{tpu_custom_call.1} parent=1 // pred_fallthru
      _
    // Predicated region
    $region30: #{tpu_custom_call.1} parent=1 // pred_check
      _
    $region31: #{tpu_custom_call.1} parent=1 // pred_check_branch
      %102 = sbr.rel (0) target = $region33
    $region32: #{tpu_custom_call.1} parent=1 // pred_region
      %s104 = ssub.s32 48, 48
      %105 = vsyncadd [#allocation15], %s104
      %s106 = sshll.u32 [#allocation14], 4
      %s107 = int_to_ptr.vmem [resolvable:$true] %s106
      %112 = dma.hbm_to_vmem [thread:$0]  %s7, 48, %s107, [#allocation15], 16, 16, 1
    $region33: #{tpu_custom_call.1} parent=1 // pred_fallthru
      _
    // Predicated region
    $region34: #{tpu_custom_call.1} parent=1 // pred_check
      _
    $region35: #{tpu_custom_call.1} parent=1 // pred_check_branch
      %114 = sbr.rel (0) target = $region37
    $region36: #{tpu_custom_call.1} parent=1 // pred_region
      %115 = dma.done [#allocation3], 2048
    $region37: #{tpu_custom_call.1} parent=1 // pred_fallthru
      _
    // Predicated region
    $region38: #{tpu_custom_call.1} parent=1 // pred_check
      _
    $region39: #{tpu_custom_call.1} parent=1 // pred_check_branch
      %117 = sbr.rel (0) target = $region41
    $region40: #{tpu_custom_call.1} parent=1 // pred_region
      %118 = dma.done [#allocation6], 1024
    $region41: #{tpu_custom_call.1} parent=1 // pred_fallthru
      _
    // Predicated region
    $region42: #{tpu_custom_call.1} parent=1 // pred_check
      _
    $region43: #{tpu_custom_call.1} parent=1 // pred_check_branch
      %120 = sbr.rel (0) target = $region45
    $region44: #{tpu_custom_call.1} parent=1 // pred_region
      %121 = dma.done [#allocation6], 1024
    $region45: #{tpu_custom_call.1} parent=1 // pred_fallthru
      _
    // Predicated region
    $region46: #{tpu_custom_call.1} parent=1 // pred_check
      _
    $region47: #{tpu_custom_call.1} parent=1 // pred_check_branch
      %123 = sbr.rel (0) target = $region49
    $region48: #{tpu_custom_call.1} parent=1 // pred_region
      %124 = dma.done [#allocation9], 16
    $region49: #{tpu_custom_call.1} parent=1 // pred_fallthru
      _
    // Predicated region
    $region50: #{tpu_custom_call.1} parent=1 // pred_check
      _
    $region51: #{tpu_custom_call.1} parent=1 // pred_check_branch
      %126 = sbr.rel (0) target = $region53
    $region52: #{tpu_custom_call.1} parent=1 // pred_region
      %127 = dma.done [#allocation9], 6144
    $region53: #{tpu_custom_call.1} parent=1 // pred_fallthru
      _
    // Predicated region
    $region54: #{tpu_custom_call.1} parent=1 // pred_check
      _
    $region55: #{tpu_custom_call.1} parent=1 // pred_check_branch
      %129 = sbr.rel (0) target = $region57
    $region56: #{tpu_custom_call.1} parent=1 // pred_region
      %130 = dma.done [#allocation12], 48
    $region57: #{tpu_custom_call.1} parent=1 // pred_fallthru
      _
    // Predicated region
    $region58: #{tpu_custom_call.1} parent=1 // pred_check
      _
    $region59: #{tpu_custom_call.1} parent=1 // pred_check_branch
      %132 = sbr.rel (0) target = $region61
    $region60: #{tpu_custom_call.1} parent=1 // pred_region
      %133 = dma.done [#allocation12], 48
    $region61: #{tpu_custom_call.1} parent=1 // pred_fallthru
      _
    // Predicated region
    $region62: #{tpu_custom_call.1} parent=1 // pred_check
      _
    $region63: #{tpu_custom_call.1} parent=1 // pred_check_branch
      %135 = sbr.rel (0) target = $region65
    $region64: #{tpu_custom_call.1} parent=1 // pred_region
      %136 = dma.done [#allocation15], 48
    $region65: #{tpu_custom_call.1} parent=1 // pred_fallthru
      _
    %v138 = vld [vmem:[#allocation5] sm:$0xf]
    %v139 = vld [vmem:[#allocation5 + $0x4] sm:$0xf]
    %v140 = vld [vmem:[#allocation5 + $0x8] sm:$0xf]
    %v141 = vld [vmem:[#allocation5 + $0xc] sm:$0xf]
    %v142 = vld [vmem:[#allocation5 + $0x10] sm:$0xf]
    %v143 = vld [vmem:[#allocation5 + $0x14] sm:$0xf]
    %v144 = vld [vmem:[#allocation5 + $0x18] sm:$0xf]
    %v145 = vld [vmem:[#allocation5 + $0x1c] sm:$0xf]
    %v146 = vld [vmem:[#allocation5 + $0x20] sm:$0xf]
    %v147 = vld [vmem:[#allocation5 + $0x24] sm:$0xf]
    %v148 = vld [vmem:[#allocation5 + $0x28] sm:$0xf]
    %v149 = vld [vmem:[#allocation5 + $0x2c] sm:$0xf]
    %v150 = vld [vmem:[#allocation5 + $0x30] sm:$0xf]
    %v151 = vld [vmem:[#allocation5 + $0x34] sm:$0xf]
    %v152 = vld [vmem:[#allocation5 + $0x38] sm:$0xf]
    %v153 = vld [vmem:[#allocation5 + $0x3c] sm:$0xf]
    %v154 = vld [vmem:[#allocation2] sm:$0xff]
    %v155 = vld [vmem:[#allocation2 + $0x8] sm:$0xff]
    %v156 = vld [vmem:[#allocation2 + $0x10] sm:$0xff]
    %v157 = vld [vmem:[#allocation2 + $0x18] sm:$0xff]
    %v158 = vld [vmem:[#allocation2 + $0x20] sm:$0xff]
    %v159 = vld [vmem:[#allocation2 + $0x28] sm:$0xff]
    %v160 = vld [vmem:[#allocation2 + $0x30] sm:$0xff]
    %v161 = vld [vmem:[#allocation2 + $0x38] sm:$0xff]
    %v162 = vld [vmem:[#allocation2 + $0x40] sm:$0xff]
    %v163 = vld [vmem:[#allocation2 + $0x48] sm:$0xff]
    %v164 = vld [vmem:[#allocation2 + $0x50] sm:$0xff]
    %v165 = vld [vmem:[#allocation2 + $0x58] sm:$0xff]
    %v166 = vld [vmem:[#allocation2 + $0x60] sm:$0xff]
    %v167 = vld [vmem:[#allocation2 + $0x68] sm:$0xff]
    %v168 = vld [vmem:[#allocation2 + $0x70] sm:$0xff]
    %v169 = vld [vmem:[#allocation2 + $0x78] sm:$0xff]
    %v170 = vpack.c.bf16 %v155, %v154
    %v171 = vpack.c.bf16 %v157, %v156
    %v172 = vpack.c.bf16 %v159, %v158
    %v173 = vpack.c.bf16 %v161, %v160
    %v174 = vpack.c.bf16 %v163, %v162
    %v175 = vpack.c.bf16 %v165, %v164
    %v176 = vpack.c.bf16 %v167, %v166
    %v177 = vpack.c.bf16 %v169, %v168
    %v178 = vld [vmem:[#allocation7] sm:$0xf]
    %v179 = vld [vmem:[#allocation7 + $0x4] sm:$0xf]
    %v180 = vld [vmem:[#allocation7 + $0x8] sm:$0xf]
    %v181 = vld [vmem:[#allocation7 + $0xc] sm:$0xf]
    %v182 = vld [vmem:[#allocation7 + $0x10] sm:$0xf]
    %v183 = vld [vmem:[#allocation7 + $0x14] sm:$0xf]
    %v184 = vld [vmem:[#allocation7 + $0x18] sm:$0xf]
    %v185 = vld [vmem:[#allocation7 + $0x1c] sm:$0xf]
    %v186 = vld [vmem:[#allocation7 + $0x20] sm:$0xf]
    %v187 = vld [vmem:[#allocation7 + $0x24] sm:$0xf]
    %v188 = vld [vmem:[#allocation7 + $0x28] sm:$0xf]
    %v189 = vld [vmem:[#allocation7 + $0x2c] sm:$0xf]
    %v190 = vld [vmem:[#allocation7 + $0x30] sm:$0xf]
    %v191 = vld [vmem:[#allocation7 + $0x34] sm:$0xf]
    %v192 = vld [vmem:[#allocation7 + $0x38] sm:$0xf]
    %v193 = vld [vmem:[#allocation7 + $0x3c] sm:$0xf]
    %v194 = vld [vmem:[#allocation8] sm:$0x1]
    %v196 = vlaneseq
    %v197 = vshrl.u32 %v196, 7
    %v198 = vsub.s32 0, %v197
    %v199 = vrot.slane %v194, %v198
    %v217 = vunpack.c.l.b16 %v178
    %v218 = vunpack.c.l.b16 %v179
    %v219 = vunpack.c.l.b16 %v180
    %v220 = vunpack.c.l.b16 %v181
    %v221 = vunpack.c.l.b16 %v182
    %v222 = vunpack.c.l.b16 %v183
    %v223 = vunpack.c.l.b16 %v184
    %v224 = vunpack.c.l.b16 %v185
    %v225 = vunpack.c.l.b16 %v186
    %v226 = vunpack.c.l.b16 %v187
    %v227 = vunpack.c.l.b16 %v188
    %v228 = vunpack.c.l.b16 %v189
    %v229 = vunpack.c.l.b16 %v190
    %v230 = vunpack.c.l.b16 %v191
    %v231 = vunpack.c.l.b16 %v192
    %v232 = vunpack.c.l.b16 %v193
    %v233 = vpack.c.b16 %v218, %v217
    %v234 = vpack.c.b16 %v220, %v219
    %v235 = vpack.c.b16 %v222, %v221
    %v236 = vpack.c.b16 %v224, %v223
    %v237 = vpack.c.b16 %v226, %v225
    %v238 = vpack.c.b16 %v228, %v227
    %v239 = vpack.c.b16 %v230, %v229
    %v240 = vpack.c.b16 %v232, %v231
    %249 = vmatprep.subr.bf16.mxu0 0
    %250 = vmatpush1.bf16.msra.mxu0 %v233
    %251 = vmatprep.subr.bf16.mxu0 0
    %252 = vmatpush1.bf16.msra.mxu0 %v234
    %253 = vmatprep.subr.bf16.mxu0 0
    %254 = vmatpush1.bf16.msra.mxu0 %v235
    %255 = vmatprep.subr.bf16.mxu0 0
    %256 = vmatpush1.bf16.msra.mxu0 %v236
    %257 = vmatprep.subr.bf16.mxu0 0
    %258 = vmatpush1.bf16.msra.mxu0 %v237
    %259 = vmatprep.subr.bf16.mxu0 0
    %260 = vmatpush1.bf16.msra.mxu0 %v238
    %261 = vmatprep.subr.bf16.mxu0 0
    %262 = vmatpush1.bf16.msra.mxu0 %v239
    %263 = vmatprep.subr.bf16.mxu0 0
    %264 = vmatpush1.bf16.msra.mxu0 %v240
    %265 = vmatprep.subr.bf16.mxu0 0
    %266 = vmatpush1.bf16.msra.mxu0 0
    %267 = vmatprep.subr.bf16.mxu0 0
    %268 = vmatpush1.bf16.msra.mxu0 0
    %269 = vmatprep.subr.bf16.mxu0 0
    %270 = vmatpush1.bf16.msra.mxu0 0
    %271 = vmatprep.subr.bf16.mxu0 0
    %272 = vmatpush1.bf16.msra.mxu0 0
    %273 = vmatprep.subr.bf16.mxu0 0
    %274 = vmatpush1.bf16.msra.mxu0 0
    %275 = vmatprep.subr.bf16.mxu0 0
    %276 = vmatpush1.bf16.msra.mxu0 0
    %277 = vmatprep.subr.bf16.mxu0 0
    %278 = vmatpush1.bf16.msra.mxu0 0
    %279 = vmatprep.subr.bf16.mxu0 0
    %280 = vmatpush1.bf16.msra.mxu0 0
    %281 = vmatprep.mubr.bf16.mxu0 0
    %282 = vmatmul.mubr.bf16.gmra.mrb[0].mxu0 %v170
    %v283 = vpop.f32.mrb[0].mxu0
    %v284 = vadd.f32 %v199, %v283
    %v285 = vpop.f32.mrb[0].mxu0
    %v286 = vpop.f32.mrb[0].mxu0
    %v287 = vadd.f32 %v199, %v286
    %v288 = vpop.f32.mrb[0].mxu0
    %289 = vmatprep.mubr.bf16.mxu0 0
    %290 = vmatmul.mubr.bf16.gmra.mrb[0].mxu0 %v171
    %v291 = vpop.f32.mrb[0].mxu0
    %v292 = vadd.f32 %v199, %v291
    %v293 = vpop.f32.mrb[0].mxu0
    %v294 = vpop.f32.mrb[0].mxu0
    %v295 = vadd.f32 %v199, %v294
    %v296 = vpop.f32.mrb[0].mxu0
    %297 = vmatprep.mubr.bf16.mxu0 0
    %298 = vmatmul.mubr.bf16.gmra.mrb[0].mxu0 %v172
    %v299 = vpop.f32.mrb[0].mxu0
    %v300 = vadd.f32 %v199, %v299
    %v301 = vpop.f32.mrb[0].mxu0
    %v302 = vpop.f32.mrb[0].mxu0
    %v303 = vadd.f32 %v199, %v302
    %v304 = vpop.f32.mrb[0].mxu0
    %305 = vmatprep.mubr.bf16.mxu0 0
    %306 = vmatmul.mubr.bf16.gmra.mrb[0].mxu0 %v173
    %v307 = vpop.f32.mrb[0].mxu0
    %v308 = vadd.f32 %v199, %v307
    %v309 = vpop.f32.mrb[0].mxu0
    %v310 = vpop.f32.mrb[0].mxu0
    %v311 = vadd.f32 %v199, %v310
    %v312 = vpop.f32.mrb[0].mxu0
    %313 = vmatprep.mubr.bf16.mxu0 0
    %314 = vmatmul.mubr.bf16.gmra.mrb[0].mxu0 %v174
    %v315 = vpop.f32.mrb[0].mxu0
    %v316 = vadd.f32 %v199, %v315
    %v317 = vpop.f32.mrb[0].mxu0
    %v318 = vpop.f32.mrb[0].mxu0
    %v319 = vadd.f32 %v199, %v318
    %v320 = vpop.f32.mrb[0].mxu0
    %321 = vmatprep.mubr.bf16.mxu0 0
    %322 = vmatmul.mubr.bf16.gmra.mrb[0].mxu0 %v175
    %v323 = vpop.f32.mrb[0].mxu0
    %v324 = vadd.f32 %v199, %v323
    %v325 = vpop.f32.mrb[0].mxu0
    %v326 = vpop.f32.mrb[0].mxu0
    %v327 = vadd.f32 %v199, %v326
    %v328 = vpop.f32.mrb[0].mxu0
    %329 = vmatprep.mubr.bf16.mxu0 0
    %330 = vmatmul.mubr.bf16.gmra.mrb[0].mxu0 %v176
    %v331 = vpop.f32.mrb[0].mxu0
    %v332 = vadd.f32 %v199, %v331
    %v333 = vpop.f32.mrb[0].mxu0
    %v334 = vpop.f32.mrb[0].mxu0
    %v335 = vadd.f32 %v199, %v334
    %v336 = vpop.f32.mrb[0].mxu0
    %337 = vmatprep.mubr.bf16.mxu0 0
    %338 = vmatmul.mubr.bf16.gmra.mrb[0].mxu0 %v177
    %v339 = vpop.f32.mrb[0].mxu0
    %v340 = vadd.f32 %v199, %v339
    %v341 = vpop.f32.mrb[0].mxu0
    %v342 = vpop.f32.mrb[0].mxu0
    %v343 = vadd.f32 %v199, %v342
    %v344 = vpop.f32.mrb[0].mxu0
    %345 = vdwg.mxu0
    %v346 = vpack.c.bf16 %v287, %v284
    %v347 = vpack.c.bf16 %v295, %v292
    %v348 = vpack.c.bf16 %v303, %v300
    %v349 = vpack.c.bf16 %v311, %v308
    %v350 = vpack.c.bf16 %v319, %v316
    %v351 = vpack.c.bf16 %v327, %v324
    %v352 = vpack.c.bf16 %v335, %v332
    %v353 = vpack.c.bf16 %v343, %v340
    %v370 = vunpack.c.l.b16 %v138
    %v371 = vunpack.c.l.b16 %v139
    %v372 = vunpack.c.l.b16 %v140
    %v373 = vunpack.c.l.b16 %v141
    %v374 = vunpack.c.l.b16 %v142
    %v375 = vunpack.c.l.b16 %v143
    %v376 = vunpack.c.l.b16 %v144
    %v377 = vunpack.c.l.b16 %v145
    %v378 = vunpack.c.l.b16 %v146
    %v379 = vunpack.c.l.b16 %v147
    %v380 = vunpack.c.l.b16 %v148
    %v381 = vunpack.c.l.b16 %v149
    %v382 = vunpack.c.l.b16 %v150
    %v383 = vunpack.c.l.b16 %v151
    %v384 = vunpack.c.l.b16 %v152
    %v385 = vunpack.c.l.b16 %v153
    %v386 = vpack.c.b16 %v371, %v370
    %v387 = vpack.c.b16 %v373, %v372
    %v388 = vpack.c.b16 %v375, %v374
    %v389 = vpack.c.b16 %v377, %v376
    %v390 = vpack.c.b16 %v379, %v378
    %v391 = vpack.c.b16 %v381, %v380
    %v392 = vpack.c.b16 %v383, %v382
    %v393 = vpack.c.b16 %v385, %v384
    %402 = vmatprep.subr.bf16.mxu0 0
    %403 = vmatpush1.bf16.msra.mxu0 %v346
    %404 = vmatprep.subr.bf16.mxu0 0
    %405 = vmatpush1.bf16.msra.mxu0 %v347
    %406 = vmatprep.subr.bf16.mxu0 0
    %407 = vmatpush1.bf16.msra.mxu0 %v348
    %408 = vmatprep.subr.bf16.mxu0 0
    %409 = vmatpush1.bf16.msra.mxu0 %v349
    %410 = vmatprep.subr.bf16.mxu0 0
    %411 = vmatpush1.bf16.msra.mxu0 %v350
    %412 = vmatprep.subr.bf16.mxu0 0
    %413 = vmatpush1.bf16.msra.mxu0 %v351
    %414 = vmatprep.subr.bf16.mxu0 0
    %415 = vmatpush1.bf16.msra.mxu0 %v352
    %416 = vmatprep.subr.bf16.mxu0 0
    %417 = vmatpush1.bf16.msra.mxu0 %v353
    %418 = vmatprep.subr.bf16.mxu0 0
    %419 = vmatpush1.bf16.msra.mxu0 0
    %420 = vmatprep.subr.bf16.mxu0 0
    %421 = vmatpush1.bf16.msra.mxu0 0
    %422 = vmatprep.subr.bf16.mxu0 0
    %423 = vmatpush1.bf16.msra.mxu0 0
    %424 = vmatprep.subr.bf16.mxu0 0
    %425 = vmatpush1.bf16.msra.mxu0 0
    %426 = vmatprep.subr.bf16.mxu0 0
    %427 = vmatpush1.bf16.msra.mxu0 0
    %428 = vmatprep.subr.bf16.mxu0 0
    %429 = vmatpush1.bf16.msra.mxu0 0
    %430 = vmatprep.subr.bf16.mxu0 0
    %431 = vmatpush1.bf16.msra.mxu0 0
    %432 = vmatprep.subr.bf16.mxu0 0
    %433 = vmatpush1.bf16.msra.mxu0 0
    %434 = vmatprep.mubr.bf16.mxu0 0
    %435 = vmatmul.mubr.bf16.gmra.mrb[0].mxu0 %v386
    %v436 = vpop.f32.mrb[0].mxu0
    %v437 = vadd.f32 0.0, %v436
    %v438 = vpop.f32.mrb[0].mxu0
    %v439 = vpop.f32.mrb[0].mxu0
    %v440 = vadd.f32 0.0, %v439
    %v441 = vpop.f32.mrb[0].mxu0
    %442 = vmatprep.mubr.bf16.mxu0 0
    %443 = vmatmul.mubr.bf16.gmra.mrb[0].mxu0 %v387
    %v444 = vpop.f32.mrb[0].mxu0
    %v445 = vadd.f32 0.0, %v444
    %v446 = vpop.f32.mrb[0].mxu0
    %v447 = vpop.f32.mrb[0].mxu0
    %v448 = vadd.f32 0.0, %v447
    %v449 = vpop.f32.mrb[0].mxu0
    %450 = vmatprep.mubr.bf16.mxu0 0
    %451 = vmatmul.mubr.bf16.gmra.mrb[0].mxu0 %v388
    %v452 = vpop.f32.mrb[0].mxu0
    %v453 = vadd.f32 0.0, %v452
    %v454 = vpop.f32.mrb[0].mxu0
    %v455 = vpop.f32.mrb[0].mxu0
    %v456 = vadd.f32 0.0, %v455
    %v457 = vpop.f32.mrb[0].mxu0
    %458 = vmatprep.mubr.bf16.mxu0 0
    %459 = vmatmul.mubr.bf16.gmra.mrb[0].mxu0 %v389
    %v460 = vpop.f32.mrb[0].mxu0
    %v461 = vadd.f32 0.0, %v460
    %v462 = vpop.f32.mrb[0].mxu0
    %v463 = vpop.f32.mrb[0].mxu0
    %v464 = vadd.f32 0.0, %v463
    %v465 = vpop.f32.mrb[0].mxu0
    %466 = vmatprep.mubr.bf16.mxu0 0
    %467 = vmatmul.mubr.bf16.gmra.mrb[0].mxu0 %v390
    %v468 = vpop.f32.mrb[0].mxu0
    %v469 = vadd.f32 0.0, %v468
    %v470 = vpop.f32.mrb[0].mxu0
    %v471 = vpop.f32.mrb[0].mxu0
    %v472 = vadd.f32 0.0, %v471
    %v473 = vpop.f32.mrb[0].mxu0
    %474 = vmatprep.mubr.bf16.mxu0 0
    %475 = vmatmul.mubr.bf16.gmra.mrb[0].mxu0 %v391
    %v476 = vpop.f32.mrb[0].mxu0
    %v477 = vadd.f32 0.0, %v476
    %v478 = vpop.f32.mrb[0].mxu0
    %v479 = vpop.f32.mrb[0].mxu0
    %v480 = vadd.f32 0.0, %v479
    %v481 = vpop.f32.mrb[0].mxu0
    %482 = vmatprep.mubr.bf16.mxu0 0
    %483 = vmatmul.mubr.bf16.gmra.mrb[0].mxu0 %v392
    %v484 = vpop.f32.mrb[0].mxu0
    %v485 = vadd.f32 0.0, %v484
    %v486 = vpop.f32.mrb[0].mxu0
    %v487 = vpop.f32.mrb[0].mxu0
    %v488 = vadd.f32 0.0, %v487
    %v489 = vpop.f32.mrb[0].mxu0
    %490 = vmatprep.mubr.bf16.mxu0 0
    %491 = vmatmul.mubr.bf16.gmra.mrb[0].mxu0 %v393
    %v492 = vpop.f32.mrb[0].mxu0
    %v493 = vadd.f32 0.0, %v492
    %v494 = vpop.f32.mrb[0].mxu0
    %v495 = vpop.f32.mrb[0].mxu0
    %v496 = vadd.f32 0.0, %v495
    %v497 = vpop.f32.mrb[0].mxu0
    %498 = vdwg.mxu0
    %v499 = vpack.c.bf16 %v440, %v437
    %v500 = vpack.c.bf16 %v448, %v445
    %v501 = vpack.c.bf16 %v456, %v453
    %v502 = vpack.c.bf16 %v464, %v461
    %v503 = vpack.c.bf16 %v472, %v469
    %v504 = vpack.c.bf16 %v480, %v477
    %v505 = vpack.c.bf16 %v488, %v485
    %v506 = vpack.c.bf16 %v496, %v493
    %v507 = vld [vmem:[#allocation10] sm:$0xf]
    %v508 = vld [vmem:[#allocation10 + $0x4] sm:$0xf]
    %v509 = vld [vmem:[#allocation10 + $0x8] sm:$0xf]
    %v510 = vld [vmem:[#allocation10 + $0xc] sm:$0xf]
    %v511 = vld [vmem:[#allocation10 + $0x10] sm:$0xf]
    %v512 = vld [vmem:[#allocation10 + $0x14] sm:$0xf]
    %v513 = vld [vmem:[#allocation10 + $0x18] sm:$0xf]
    %v514 = vld [vmem:[#allocation10 + $0x1c] sm:$0xf]
    %v515 = vld [vmem:[#allocation10 + $0x20] sm:$0xf]
    %v516 = vld [vmem:[#allocation10 + $0x24] sm:$0xf]
    %v517 = vld [vmem:[#allocation10 + $0x28] sm:$0xf]
    %v518 = vld [vmem:[#allocation10 + $0x2c] sm:$0xf]
    %v519 = vld [vmem:[#allocation10 + $0x30] sm:$0xf]
    %v520 = vld [vmem:[#allocation10 + $0x34] sm:$0xf]
    %v521 = vld [vmem:[#allocation10 + $0x38] sm:$0xf]
    %v522 = vld [vmem:[#allocation10 + $0x3c] sm:$0xf]
    %v523 = vld [vmem:[#allocation10 + $0x40] sm:$0xf]
    %v524 = vld [vmem:[#allocation10 + $0x44] sm:$0xf]
    %v525 = vld [vmem:[#allocation10 + $0x48] sm:$0xf]
    %v526 = vld [vmem:[#allocation10 + $0x4c] sm:$0xf]
    %v527 = vld [vmem:[#allocation10 + $0x50] sm:$0xf]
    %v528 = vld [vmem:[#allocation10 + $0x54] sm:$0xf]
    %v529 = vld [vmem:[#allocation10 + $0x58] sm:$0xf]
    %v530 = vld [vmem:[#allocation10 + $0x5c] sm:$0xf]
    %v531 = vld [vmem:[#allocation10 + $0x60] sm:$0xf]
    %v532 = vld [vmem:[#allocation10 + $0x64] sm:$0xf]
    %v533 = vld [vmem:[#allocation10 + $0x68] sm:$0xf]
    %v534 = vld [vmem:[#allocation10 + $0x6c] sm:$0xf]
    %v535 = vld [vmem:[#allocation10 + $0x70] sm:$0xf]
    %v536 = vld [vmem:[#allocation10 + $0x74] sm:$0xf]
    %v537 = vld [vmem:[#allocation10 + $0x78] sm:$0xf]
    %v538 = vld [vmem:[#allocation10 + $0x7c] sm:$0xf]
    %v539 = vld [vmem:[#allocation11] sm:$0x1]
    %v541 = vlaneseq
    %v542 = vshrl.u32 %v541, 7
    %v543 = vsub.s32 0, %v542
    %v544 = vrot.slane %v539, %v543
    %v578 = vunpack.c.l.b16 %v507
    %v579 = vunpack.c.l.b16 %v508
    %v580 = vunpack.c.l.b16 %v509
    %v581 = vunpack.c.l.b16 %v510
    %v582 = vunpack.c.l.b16 %v511
    %v583 = vunpack.c.l.b16 %v512
    %v584 = vunpack.c.l.b16 %v513
    %v585 = vunpack.c.l.b16 %v514
    %v586 = vunpack.c.l.b16 %v515
    %v587 = vunpack.c.l.b16 %v516
    %v588 = vunpack.c.l.b16 %v517
    %v589 = vunpack.c.l.b16 %v518
    %v590 = vunpack.c.l.b16 %v519
    %v591 = vunpack.c.l.b16 %v520
    %v592 = vunpack.c.l.b16 %v521
    %v593 = vunpack.c.l.b16 %v522
    %v594 = vunpack.c.l.b16 %v523
    %v595 = vunpack.c.l.b16 %v524
    %v596 = vunpack.c.l.b16 %v525
    %v597 = vunpack.c.l.b16 %v526
    %v598 = vunpack.c.l.b16 %v527
    %v599 = vunpack.c.l.b16 %v528
    %v600 = vunpack.c.l.b16 %v529
    %v601 = vunpack.c.l.b16 %v530
    %v602 = vunpack.c.l.b16 %v531
    %v603 = vunpack.c.l.b16 %v532
    %v604 = vunpack.c.l.b16 %v533
    %v605 = vunpack.c.l.b16 %v534
    %v606 = vunpack.c.l.b16 %v535
    %v607 = vunpack.c.l.b16 %v536
    %v608 = vunpack.c.l.b16 %v537
    %v609 = vunpack.c.l.b16 %v538
    %v610 = vpack.c.b16 %v579, %v578
    %v611 = vpack.c.b16 %v581, %v580
    %v612 = vpack.c.b16 %v583, %v582
    %v613 = vpack.c.b16 %v585, %v584
    %v614 = vpack.c.b16 %v587, %v586
    %v615 = vpack.c.b16 %v589, %v588
    %v616 = vpack.c.b16 %v591, %v590
    %v617 = vpack.c.b16 %v593, %v592
    %v618 = vpack.c.b16 %v595, %v594
    %v619 = vpack.c.b16 %v597, %v596
    %v620 = vpack.c.b16 %v599, %v598
    %v621 = vpack.c.b16 %v601, %v600
    %v622 = vpack.c.b16 %v603, %v602
    %v623 = vpack.c.b16 %v605, %v604
    %v624 = vpack.c.b16 %v607, %v606
    %v625 = vpack.c.b16 %v609, %v608
    %642 = vmatprep.subr.bf16.mxu0 0
    %643 = vmatpush1.bf16.msra.mxu0 %v610
    %644 = vmatprep.subr.bf16.mxu0 0
    %645 = vmatpush1.bf16.msra.mxu0 %v611
    %646 = vmatprep.subr.bf16.mxu0 0
    %647 = vmatpush1.bf16.msra.mxu0 %v612
    %648 = vmatprep.subr.bf16.mxu0 0
    %649 = vmatpush1.bf16.msra.mxu0 %v613
    %650 = vmatprep.subr.bf16.mxu0 0
    %651 = vmatpush1.bf16.msra.mxu0 %v614
    %652 = vmatprep.subr.bf16.mxu0 0
    %653 = vmatpush1.bf16.msra.mxu0 %v615
    %654 = vmatprep.subr.bf16.mxu0 0
    %655 = vmatpush1.bf16.msra.mxu0 %v616
    %656 = vmatprep.subr.bf16.mxu0 0
    %657 = vmatpush1.bf16.msra.mxu0 %v617
    %658 = vmatprep.subr.bf16.mxu0 0
    %659 = vmatpush1.bf16.msra.mxu0 %v618
    %660 = vmatprep.subr.bf16.mxu0 0
    %661 = vmatpush1.bf16.msra.mxu0 %v619
    %662 = vmatprep.subr.bf16.mxu0 0
    %663 = vmatpush1.bf16.msra.mxu0 %v620
    %664 = vmatprep.subr.bf16.mxu0 0
    %665 = vmatpush1.bf16.msra.mxu0 %v621
    %666 = vmatprep.subr.bf16.mxu0 0
    %667 = vmatpush1.bf16.msra.mxu0 %v622
    %668 = vmatprep.subr.bf16.mxu0 0
    %669 = vmatpush1.bf16.msra.mxu0 %v623
    %670 = vmatprep.subr.bf16.mxu0 0
    %671 = vmatpush1.bf16.msra.mxu0 %v624
    %672 = vmatprep.subr.bf16.mxu0 0
    %673 = vmatpush1.bf16.msra.mxu0 %v625
    %674 = vmatprep.mubr.bf16.mxu0 %v499
    %675 = vmatmul.mubr.bf16.gmra.mrb[0].mxu0 %v346
    %v676 = vpop.f32.mrb[0].mxu0
    %v677 = vadd.f32 %v544, %v676
    %v678 = vpop.f32.mrb[0].mxu0
    %v679 = vpop.f32.mrb[0].mxu0
    %v680 = vadd.f32 %v544, %v679
    %v681 = vpop.f32.mrb[0].mxu0
    %682 = vmatprep.mubr.bf16.mxu0 %v500
    %683 = vmatmul.mubr.bf16.gmra.mrb[0].mxu0 %v347
    %v684 = vpop.f32.mrb[0].mxu0
    %v685 = vadd.f32 %v544, %v684
    %v686 = vpop.f32.mrb[0].mxu0
    %v687 = vpop.f32.mrb[0].mxu0
    %v688 = vadd.f32 %v544, %v687
    %v689 = vpop.f32.mrb[0].mxu0
    %690 = vmatprep.mubr.bf16.mxu0 %v501
    %691 = vmatmul.mubr.bf16.gmra.mrb[0].mxu0 %v348
    %v692 = vpop.f32.mrb[0].mxu0
    %v693 = vadd.f32 %v544, %v692
    %v694 = vpop.f32.mrb[0].mxu0
    %v695 = vpop.f32.mrb[0].mxu0
    %v696 = vadd.f32 %v544, %v695
    %v697 = vpop.f32.mrb[0].mxu0
    %698 = vmatprep.mubr.bf16.mxu0 %v502
    %699 = vmatmul.mubr.bf16.gmra.mrb[0].mxu0 %v349
    %v700 = vpop.f32.mrb[0].mxu0
    %v701 = vadd.f32 %v544, %v700
    %v702 = vpop.f32.mrb[0].mxu0
    %v703 = vpop.f32.mrb[0].mxu0
    %v704 = vadd.f32 %v544, %v703
    %v705 = vpop.f32.mrb[0].mxu0
    %706 = vmatprep.mubr.bf16.mxu0 %v503
    %707 = vmatmul.mubr.bf16.gmra.mrb[0].mxu0 %v350
    %v708 = vpop.f32.mrb[0].mxu0
    %v709 = vadd.f32 %v544, %v708
    %v710 = vpop.f32.mrb[0].mxu0
    %v711 = vpop.f32.mrb[0].mxu0
    %v712 = vadd.f32 %v544, %v711
    %v713 = vpop.f32.mrb[0].mxu0
    %714 = vmatprep.mubr.bf16.mxu0 %v504
    %715 = vmatmul.mubr.bf16.gmra.mrb[0].mxu0 %v351
    %v716 = vpop.f32.mrb[0].mxu0
    %v717 = vadd.f32 %v544, %v716
    %v718 = vpop.f32.mrb[0].mxu0
    %v719 = vpop.f32.mrb[0].mxu0
    %v720 = vadd.f32 %v544, %v719
    %v721 = vpop.f32.mrb[0].mxu0
    %722 = vmatprep.mubr.bf16.mxu0 %v505
    %723 = vmatmul.mubr.bf16.gmra.mrb[0].mxu0 %v352
    %v724 = vpop.f32.mrb[0].mxu0
    %v725 = vadd.f32 %v544, %v724
    %v726 = vpop.f32.mrb[0].mxu0
    %v727 = vpop.f32.mrb[0].mxu0
    %v728 = vadd.f32 %v544, %v727
    %v729 = vpop.f32.mrb[0].mxu0
    %730 = vmatprep.mubr.bf16.mxu0 %v506
    %731 = vmatmul.mubr.bf16.gmra.mrb[0].mxu0 %v353
    %v732 = vpop.f32.mrb[0].mxu0
    %v733 = vadd.f32 %v544, %v732
    %v734 = vpop.f32.mrb[0].mxu0
    %v735 = vpop.f32.mrb[0].mxu0
    %v736 = vadd.f32 %v544, %v735
    %v737 = vpop.f32.mrb[0].mxu0
    %738 = vdwg.mxu0
    %v739 = vmul.f32 %v677, %v677
    %v740 = vmul.f32 %v680, %v680
    %v741 = vmul.f32 %v685, %v685
    %v742 = vmul.f32 %v688, %v688
    %v743 = vmul.f32 %v693, %v693
    %v744 = vmul.f32 %v696, %v696
    %v745 = vmul.f32 %v701, %v701
    %v746 = vmul.f32 %v704, %v704
    %v747 = vmul.f32 %v709, %v709
    %v748 = vmul.f32 %v712, %v712
    %v749 = vmul.f32 %v717, %v717
    %v750 = vmul.f32 %v720, %v720
    %v751 = vmul.f32 %v725, %v725
    %v752 = vmul.f32 %v728, %v728
    %v753 = vmul.f32 %v733, %v733
    %v754 = vmul.f32 %v736, %v736
    %755 = vadd.xlane.f32.xlu0 %v739
    %v756 = vpop.xlane.xlu0 %755
    %757 = vadd.xlane.f32.xlu0 %v740
    %v758 = vpop.xlane.xlu0 %757
    %759 = vadd.xlane.f32.xlu0 %v741
    %v760 = vpop.xlane.xlu0 %759
    %761 = vadd.xlane.f32.xlu0 %v742
    %v762 = vpop.xlane.xlu0 %761
    %763 = vadd.xlane.f32.xlu0 %v743
    %v764 = vpop.xlane.xlu0 %763
    %765 = vadd.xlane.f32.xlu0 %v744
    %v766 = vpop.xlane.xlu0 %765
    %767 = vadd.xlane.f32.xlu0 %v745
    %v768 = vpop.xlane.xlu0 %767
    %769 = vadd.xlane.f32.xlu0 %v746
    %v770 = vpop.xlane.xlu0 %769
    %771 = vadd.xlane.f32.xlu0 %v747
    %v772 = vpop.xlane.xlu0 %771
    %773 = vadd.xlane.f32.xlu0 %v748
    %v774 = vpop.xlane.xlu0 %773
    %775 = vadd.xlane.f32.xlu0 %v749
    %v776 = vpop.xlane.xlu0 %775
    %777 = vadd.xlane.f32.xlu0 %v750
    %v778 = vpop.xlane.xlu0 %777
    %779 = vadd.xlane.f32.xlu0 %v751
    %v780 = vpop.xlane.xlu0 %779
    %781 = vadd.xlane.f32.xlu0 %v752
    %v782 = vpop.xlane.xlu0 %781
    %783 = vadd.xlane.f32.xlu0 %v753
    %v784 = vpop.xlane.xlu0 %783
    %785 = vadd.xlane.f32.xlu0 %v754
    %v786 = vpop.xlane.xlu0 %785
    %v787 = vmax.f32 %v756, 1e-24
    %v788 = vmax.f32 %v758, 1e-24
    %v789 = vmax.f32 %v760, 1e-24
    %v790 = vmax.f32 %v762, 1e-24
    %v791 = vmax.f32 %v764, 1e-24
    %v792 = vmax.f32 %v766, 1e-24
    %v793 = vmax.f32 %v768, 1e-24
    %v794 = vmax.f32 %v770, 1e-24
    %v795 = vmax.f32 %v772, 1e-24
    %v796 = vmax.f32 %v774, 1e-24
    %v797 = vmax.f32 %v776, 1e-24
    %v798 = vmax.f32 %v778, 1e-24
    %v799 = vmax.f32 %v780, 1e-24
    %v800 = vmax.f32 %v782, 1e-24
    %v801 = vmax.f32 %v784, 1e-24
    %v802 = vmax.f32 %v786, 1e-24
    %v803 = vrsqrt.pop %v787
    %v804 = vrsqrt.pop %v788
    %v805 = vrsqrt.pop %v789
    %v806 = vrsqrt.pop %v790
    %v807 = vrsqrt.pop %v791
    %v808 = vrsqrt.pop %v792
    %v809 = vrsqrt.pop %v793
    %v810 = vrsqrt.pop %v794
    %v811 = vrsqrt.pop %v795
    %v812 = vrsqrt.pop %v796
    %v813 = vrsqrt.pop %v797
    %v814 = vrsqrt.pop %v798
    %v815 = vrsqrt.pop %v799
    %v816 = vrsqrt.pop %v800
    %v817 = vrsqrt.pop %v801
    %v818 = vrsqrt.pop %v802
    %v819 = vmul.f32 %v677, %v803
    %v820 = vmul.f32 %v680, %v804
    %v821 = vmul.f32 %v685, %v805
    %v822 = vmul.f32 %v688, %v806
    %v823 = vmul.f32 %v693, %v807
    %v824 = vmul.f32 %v696, %v808
    %v825 = vmul.f32 %v701, %v809
    %v826 = vmul.f32 %v704, %v810
    %v827 = vmul.f32 %v709, %v811
    %v828 = vmul.f32 %v712, %v812
    %v829 = vmul.f32 %v717, %v813
    %v830 = vmul.f32 %v720, %v814
    %v831 = vmul.f32 %v725, %v815
    %v832 = vmul.f32 %v728, %v816
    %v833 = vmul.f32 %v733, %v817
    %v834 = vmul.f32 %v736, %v818
    %v835 = vmax.f32 %v819, 0.0
    %v836 = vmax.f32 %v820, 0.0
    %v837 = vmax.f32 %v821, 0.0
    %v838 = vmax.f32 %v822, 0.0
    %v839 = vmax.f32 %v823, 0.0
    %v840 = vmax.f32 %v824, 0.0
    %v841 = vmax.f32 %v825, 0.0
    %v842 = vmax.f32 %v826, 0.0
    %v843 = vmax.f32 %v827, 0.0
    %v844 = vmax.f32 %v828, 0.0
    %v845 = vmax.f32 %v829, 0.0
    %v846 = vmax.f32 %v830, 0.0
    %v847 = vmax.f32 %v831, 0.0
    %v848 = vmax.f32 %v832, 0.0
    %v849 = vmax.f32 %v833, 0.0
    %v850 = vmax.f32 %v834, 0.0
    %v851 = vld [vmem:[#allocation13] sm:$0x1]
    %v853 = vlaneseq
    %v854 = vshrl.u32 %v853, 7
    %v855 = vsub.s32 0, %v854
    %v856 = vrot.slane %v851, %v855
    %v858 = vmul.f32 %v835, %v856
    %v859 = vmul.f32 %v836, %v856
    %v860 = vmul.f32 %v837, %v856
    %v861 = vmul.f32 %v838, %v856
    %v862 = vmul.f32 %v839, %v856
    %v863 = vmul.f32 %v840, %v856
    %v864 = vmul.f32 %v841, %v856
    %v865 = vmul.f32 %v842, %v856
    %v866 = vmul.f32 %v843, %v856
    %v867 = vmul.f32 %v844, %v856
    %v868 = vmul.f32 %v845, %v856
    %v869 = vmul.f32 %v846, %v856
    %v870 = vmul.f32 %v847, %v856
    %v871 = vmul.f32 %v848, %v856
    %v872 = vmul.f32 %v849, %v856
    %v873 = vmul.f32 %v850, %v856
    %v874 = vld [vmem:[#allocation14] sm:$0x1]
    %v876 = vlaneseq
    %v877 = vshrl.u32 %v876, 7
    %v878 = vsub.s32 0, %v877
    %v879 = vrot.slane %v874, %v878
    %v881 = vadd.f32 %v858, %v879
    %v882 = vadd.f32 %v859, %v879
    %v883 = vadd.f32 %v860, %v879
    %v884 = vadd.f32 %v861, %v879
    %v885 = vadd.f32 %v862, %v879
    %v886 = vadd.f32 %v863, %v879
    %v887 = vadd.f32 %v864, %v879
    %v888 = vadd.f32 %v865, %v879
    %v889 = vadd.f32 %v866, %v879
    %v890 = vadd.f32 %v867, %v879
    %v891 = vadd.f32 %v868, %v879
    %v892 = vadd.f32 %v869, %v879
    %v893 = vadd.f32 %v870, %v879
    %v894 = vadd.f32 %v871, %v879
    %v895 = vadd.f32 %v872, %v879
    %v896 = vadd.f32 %v873, %v879
    %v897 = vadd.f32 %v881, %v284
    %v898 = vadd.f32 %v882, %v287
    %v899 = vadd.f32 %v883, %v292
    %v900 = vadd.f32 %v884, %v295
    %v901 = vadd.f32 %v885, %v300
    %v902 = vadd.f32 %v886, %v303
    %v903 = vadd.f32 %v887, %v308
    %v904 = vadd.f32 %v888, %v311
    %v905 = vadd.f32 %v889, %v316
    %v906 = vadd.f32 %v890, %v319
    %v907 = vadd.f32 %v891, %v324
    %v908 = vadd.f32 %v892, %v327
    %v909 = vadd.f32 %v893, %v332
    %v910 = vadd.f32 %v894, %v335
    %v911 = vadd.f32 %v895, %v340
    %v912 = vadd.f32 %v896, %v343
    %v913 = vpack.c.bf16 %v898, %v897
    %v914 = vpack.c.bf16 %v900, %v899
    %v915 = vpack.c.bf16 %v902, %v901
    %v916 = vpack.c.bf16 %v904, %v903
    %v917 = vpack.c.bf16 %v906, %v905
    %v918 = vpack.c.bf16 %v908, %v907
    %v919 = vpack.c.bf16 %v910, %v909
    %v920 = vpack.c.bf16 %v912, %v911
    %921 = vmatprep.subr.bf16.mxu0 0
    %922 = vmatpush1.bf16.msra.mxu0 %v913
    %923 = vmatprep.subr.bf16.mxu0 0
    %924 = vmatpush1.bf16.msra.mxu0 %v914
    %925 = vmatprep.subr.bf16.mxu0 0
    %926 = vmatpush1.bf16.msra.mxu0 %v915
    %927 = vmatprep.subr.bf16.mxu0 0
    %928 = vmatpush1.bf16.msra.mxu0 %v916
    %929 = vmatprep.subr.bf16.mxu0 0
    %930 = vmatpush1.bf16.msra.mxu0 %v917
    %931 = vmatprep.subr.bf16.mxu0 0
    %932 = vmatpush1.bf16.msra.mxu0 %v918
    %933 = vmatprep.subr.bf16.mxu0 0
    %934 = vmatpush1.bf16.msra.mxu0 %v919
    %935 = vmatprep.subr.bf16.mxu0 0
    %936 = vmatpush1.bf16.msra.mxu0 %v920
    %937 = vmatprep.subr.bf16.mxu0 0
    %938 = vmatpush1.bf16.msra.mxu0 0
    %939 = vmatprep.subr.bf16.mxu0 0
    %940 = vmatpush1.bf16.msra.mxu0 0
    %941 = vmatprep.subr.bf16.mxu0 0
    %942 = vmatpush1.bf16.msra.mxu0 0
    %943 = vmatprep.subr.bf16.mxu0 0
    %944 = vmatpush1.bf16.msra.mxu0 0
    %945 = vmatprep.subr.bf16.mxu0 0
    %946 = vmatpush1.bf16.msra.mxu0 0
    %947 = vmatprep.subr.bf16.mxu0 0
    %948 = vmatpush1.bf16.msra.mxu0 0
    %949 = vmatprep.subr.bf16.mxu0 0
    %950 = vmatpush1.bf16.msra.mxu0 0
    %951 = vmatprep.subr.bf16.mxu0 0
    %952 = vmatpush1.bf16.msra.mxu0 0
    %953 = vmatprep.mubr.bf16.mxu0 0
    %954 = vmatmul.mubr.bf16.gmra.mrb[0].mxu0 %v386
    %v955 = vpop.f32.mrb[0].mxu0
    %v956 = vadd.f32 0.0, %v955
    %v957 = vpop.f32.mrb[0].mxu0
    %v958 = vpop.f32.mrb[0].mxu0
    %v959 = vadd.f32 0.0, %v958
    %v960 = vpop.f32.mrb[0].mxu0
    %961 = vmatprep.mubr.bf16.mxu0 0
    %962 = vmatmul.mubr.bf16.gmra.mrb[0].mxu0 %v387
    %v963 = vpop.f32.mrb[0].mxu0
    %v964 = vadd.f32 0.0, %v963
    %v965 = vpop.f32.mrb[0].mxu0
    %v966 = vpop.f32.mrb[0].mxu0
    %v967 = vadd.f32 0.0, %v966
    %v968 = vpop.f32.mrb[0].mxu0
    %969 = vmatprep.mubr.bf16.mxu0 0
    %970 = vmatmul.mubr.bf16.gmra.mrb[0].mxu0 %v388
    %v971 = vpop.f32.mrb[0].mxu0
    %v972 = vadd.f32 0.0, %v971
    %v973 = vpop.f32.mrb[0].mxu0
    %v974 = vpop.f32.mrb[0].mxu0
    %v975 = vadd.f32 0.0, %v974
    %v976 = vpop.f32.mrb[0].mxu0
    %977 = vmatprep.mubr.bf16.mxu0 0
    %978 = vmatmul.mubr.bf16.gmra.mrb[0].mxu0 %v389
    %v979 = vpop.f32.mrb[0].mxu0
    %v980 = vadd.f32 0.0, %v979
    %v981 = vpop.f32.mrb[0].mxu0
    %v982 = vpop.f32.mrb[0].mxu0
    %v983 = vadd.f32 0.0, %v982
    %v984 = vpop.f32.mrb[0].mxu0
    %985 = vmatprep.mubr.bf16.mxu0 0
    %986 = vmatmul.mubr.bf16.gmra.mrb[0].mxu0 %v390
    %v987 = vpop.f32.mrb[0].mxu0
    %v988 = vadd.f32 0.0, %v987
    %v989 = vpop.f32.mrb[0].mxu0
    %v990 = vpop.f32.mrb[0].mxu0
    %v991 = vadd.f32 0.0, %v990
    %v992 = vpop.f32.mrb[0].mxu0
    %993 = vmatprep.mubr.bf16.mxu0 0
    %994 = vmatmul.mubr.bf16.gmra.mrb[0].mxu0 %v391
    %v995 = vpop.f32.mrb[0].mxu0
    %v996 = vadd.f32 0.0, %v995
    %v997 = vpop.f32.mrb[0].mxu0
    %v998 = vpop.f32.mrb[0].mxu0
    %v999 = vadd.f32 0.0, %v998
    %v1000 = vpop.f32.mrb[0].mxu0
    %1001 = vmatprep.mubr.bf16.mxu0 0
    %1002 = vmatmul.mubr.bf16.gmra.mrb[0].mxu0 %v392
    %v1003 = vpop.f32.mrb[0].mxu0
    %v1004 = vadd.f32 0.0, %v1003
    %v1005 = vpop.f32.mrb[0].mxu0
    %v1006 = vpop.f32.mrb[0].mxu0
    %v1007 = vadd.f32 0.0, %v1006
    %v1008 = vpop.f32.mrb[0].mxu0
    %1009 = vmatprep.mubr.bf16.mxu0 0
    %1010 = vmatmul.mubr.bf16.gmra.mrb[0].mxu0 %v393
    %v1011 = vpop.f32.mrb[0].mxu0
    %v1012 = vadd.f32 0.0, %v1011
    %v1013 = vpop.f32.mrb[0].mxu0
    %v1014 = vpop.f32.mrb[0].mxu0
    %v1015 = vadd.f32 0.0, %v1014
    %v1016 = vpop.f32.mrb[0].mxu0
    %1017 = vdwg.mxu0
    %v1018 = vpack.c.bf16 %v959, %v956
    %v1019 = vpack.c.bf16 %v967, %v964
    %v1020 = vpack.c.bf16 %v975, %v972
    %v1021 = vpack.c.bf16 %v983, %v980
    %v1022 = vpack.c.bf16 %v991, %v988
    %v1023 = vpack.c.bf16 %v999, %v996
    %v1024 = vpack.c.bf16 %v1007, %v1004
    %v1025 = vpack.c.bf16 %v1015, %v1012
    %s1026 = scalar_lea.vmem [#allocation10], 128
    %v1027 = vld [vmem:[%s1026] sm:$0xf]
    %v1028 = vld [vmem:[%s1026 + $0x4] sm:$0xf]
    %v1029 = vld [vmem:[%s1026 + $0x8] sm:$0xf]
    %v1030 = vld [vmem:[%s1026 + $0xc] sm:$0xf]
    %v1031 = vld [vmem:[%s1026 + $0x10] sm:$0xf]
    %v1032 = vld [vmem:[%s1026 + $0x14] sm:$0xf]
    %v1033 = vld [vmem:[%s1026 + $0x18] sm:$0xf]
    %v1034 = vld [vmem:[%s1026 + $0x1c] sm:$0xf]
    %v1035 = vld [vmem:[%s1026 + $0x20] sm:$0xf]
    %v1036 = vld [vmem:[%s1026 + $0x24] sm:$0xf]
    %v1037 = vld [vmem:[%s1026 + $0x28] sm:$0xf]
    %v1038 = vld [vmem:[%s1026 + $0x2c] sm:$0xf]
    %v1039 = vld [vmem:[%s1026 + $0x30] sm:$0xf]
    %v1040 = vld [vmem:[%s1026 + $0x34] sm:$0xf]
    %v1041 = vld [vmem:[%s1026 + $0x38] sm:$0xf]
    %v1042 = vld [vmem:[%s1026 + $0x3c] sm:$0xf]
    %v1043 = vld [vmem:[%s1026 + $0x40] sm:$0xf]
    %v1044 = vld [vmem:[%s1026 + $0x44] sm:$0xf]
    %v1045 = vld [vmem:[%s1026 + $0x48] sm:$0xf]
    %v1046 = vld [vmem:[%s1026 + $0x4c] sm:$0xf]
    %v1047 = vld [vmem:[%s1026 + $0x50] sm:$0xf]
    %v1048 = vld [vmem:[%s1026 + $0x54] sm:$0xf]
    %v1049 = vld [vmem:[%s1026 + $0x58] sm:$0xf]
    %v1050 = vld [vmem:[%s1026 + $0x5c] sm:$0xf]
    %v1051 = vld [vmem:[%s1026 + $0x60] sm:$0xf]
    %v1052 = vld [vmem:[%s1026 + $0x64] sm:$0xf]
    %v1053 = vld [vmem:[%s1026 + $0x68] sm:$0xf]
    %v1054 = vld [vmem:[%s1026 + $0x6c] sm:$0xf]
    %v1055 = vld [vmem:[%s1026 + $0x70] sm:$0xf]
    %v1056 = vld [vmem:[%s1026 + $0x74] sm:$0xf]
    %v1057 = vld [vmem:[%s1026 + $0x78] sm:$0xf]
    %v1058 = vld [vmem:[%s1026 + $0x7c] sm:$0xf]
    %s1059 = scalar_lea.vmem [#allocation11], 1
    %v1060 = vld [vmem:[%s1059] sm:$0x1]
    %v1062 = vlaneseq
    %v1063 = vshrl.u32 %v1062, 7
    %v1064 = vsub.s32 0, %v1063
    %v1065 = vrot.slane %v1060, %v1064
    %v1099 = vunpack.c.l.b16 %v1027
    %v1100 = vunpack.c.l.b16 %v1028
    %v1101 = vunpack.c.l.b16 %v1029
    %v1102 = vunpack.c.l.b16 %v1030
    %v1103 = vunpack.c.l.b16 %v1031
    %v1104 = vunpack.c.l.b16 %v1032
    %v1105 = vunpack.c.l.b16 %v1033
    %v1106 = vunpack.c.l.b16 %v1034
    %v1107 = vunpack.c.l.b16 %v1035
    %v1108 = vunpack.c.l.b16 %v1036
    %v1109 = vunpack.c.l.b16 %v1037
    %v1110 = vunpack.c.l.b16 %v1038
    %v1111 = vunpack.c.l.b16 %v1039
    %v1112 = vunpack.c.l.b16 %v1040
    %v1113 = vunpack.c.l.b16 %v1041
    %v1114 = vunpack.c.l.b16 %v1042
    %v1115 = vunpack.c.l.b16 %v1043
    %v1116 = vunpack.c.l.b16 %v1044
    %v1117 = vunpack.c.l.b16 %v1045
    %v1118 = vunpack.c.l.b16 %v1046
    %v1119 = vunpack.c.l.b16 %v1047
    %v1120 = vunpack.c.l.b16 %v1048
    %v1121 = vunpack.c.l.b16 %v1049
    %v1122 = vunpack.c.l.b16 %v1050
    %v1123 = vunpack.c.l.b16 %v1051
    %v1124 = vunpack.c.l.b16 %v1052
    %v1125 = vunpack.c.l.b16 %v1053
    %v1126 = vunpack.c.l.b16 %v1054
    %v1127 = vunpack.c.l.b16 %v1055
    %v1128 = vunpack.c.l.b16 %v1056
    %v1129 = vunpack.c.l.b16 %v1057
    %v1130 = vunpack.c.l.b16 %v1058
    %v1131 = vpack.c.b16 %v1100, %v1099
    %v1132 = vpack.c.b16 %v1102, %v1101
    %v1133 = vpack.c.b16 %v1104, %v1103
    %v1134 = vpack.c.b16 %v1106, %v1105
    %v1135 = vpack.c.b16 %v1108, %v1107
    %v1136 = vpack.c.b16 %v1110, %v1109
    %v1137 = vpack.c.b16 %v1112, %v1111
    %v1138 = vpack.c.b16 %v1114, %v1113
    %v1139 = vpack.c.b16 %v1116, %v1115
    %v1140 = vpack.c.b16 %v1118, %v1117
    %v1141 = vpack.c.b16 %v1120, %v1119
    %v1142 = vpack.c.b16 %v1122, %v1121
    %v1143 = vpack.c.b16 %v1124, %v1123
    %v1144 = vpack.c.b16 %v1126, %v1125
    %v1145 = vpack.c.b16 %v1128, %v1127
    %v1146 = vpack.c.b16 %v1130, %v1129
    %1163 = vmatprep.subr.bf16.mxu0 0
    %1164 = vmatpush1.bf16.msra.mxu0 %v1131
    %1165 = vmatprep.subr.bf16.mxu0 0
    %1166 = vmatpush1.bf16.msra.mxu0 %v1132
    %1167 = vmatprep.subr.bf16.mxu0 0
    %1168 = vmatpush1.bf16.msra.mxu0 %v1133
    %1169 = vmatprep.subr.bf16.mxu0 0
    %1170 = vmatpush1.bf16.msra.mxu0 %v1134
    %1171 = vmatprep.subr.bf16.mxu0 0
    %1172 = vmatpush1.bf16.msra.mxu0 %v1135
    %1173 = vmatprep.subr.bf16.mxu0 0
    %1174 = vmatpush1.bf16.msra.mxu0 %v1136
    %1175 = vmatprep.subr.bf16.mxu0 0
    %1176 = vmatpush1.bf16.msra.mxu0 %v1137
    %1177 = vmatprep.subr.bf16.mxu0 0
    %1178 = vmatpush1.bf16.msra.mxu0 %v1138
    %1179 = vmatprep.subr.bf16.mxu0 0
    %1180 = vmatpush1.bf16.msra.mxu0 %v1139
    %1181 = vmatprep.subr.bf16.mxu0 0
    %1182 = vmatpush1.bf16.msra.mxu0 %v1140
    %1183 = vmatprep.subr.bf16.mxu0 0
    %1184 = vmatpush1.bf16.msra.mxu0 %v1141
    %1185 = vmatprep.subr.bf16.mxu0 0
    %1186 = vmatpush1.bf16.msra.mxu0 %v1142
    %1187 = vmatprep.subr.bf16.mxu0 0
    %1188 = vmatpush1.bf16.msra.mxu0 %v1143
    %1189 = vmatprep.subr.bf16.mxu0 0
    %1190 = vmatpush1.bf16.msra.mxu0 %v1144
    %1191 = vmatprep.subr.bf16.mxu0 0
    %1192 = vmatpush1.bf16.msra.mxu0 %v1145
    %1193 = vmatprep.subr.bf16.mxu0 0
    %1194 = vmatpush1.bf16.msra.mxu0 %v1146
    %1195 = vmatprep.mubr.bf16.mxu0 %v1018
    %1196 = vmatmul.mubr.bf16.gmra.mrb[0].mxu0 %v913
    %v1197 = vpop.f32.mrb[0].mxu0
    %v1198 = vadd.f32 %v1065, %v1197
    %v1199 = vpop.f32.mrb[0].mxu0
    %v1200 = vpop.f32.mrb[0].mxu0
    %v1201 = vadd.f32 %v1065, %v1200
    %v1202 = vpop.f32.mrb[0].mxu0
    %1203 = vmatprep.mubr.bf16.mxu0 %v1019
    %1204 = vmatmul.mubr.bf16.gmra.mrb[0].mxu0 %v914
    %v1205 = vpop.f32.mrb[0].mxu0
    %v1206 = vadd.f32 %v1065, %v1205
    %v1207 = vpop.f32.mrb[0].mxu0
    %v1208 = vpop.f32.mrb[0].mxu0
    %v1209 = vadd.f32 %v1065, %v1208
    %v1210 = vpop.f32.mrb[0].mxu0
    %1211 = vmatprep.mubr.bf16.mxu0 %v1020
    %1212 = vmatmul.mubr.bf16.gmra.mrb[0].mxu0 %v915
    %v1213 = vpop.f32.mrb[0].mxu0
    %v1214 = vadd.f32 %v1065, %v1213
    %v1215 = vpop.f32.mrb[0].mxu0
    %v1216 = vpop.f32.mrb[0].mxu0
    %v1217 = vadd.f32 %v1065, %v1216
    %v1218 = vpop.f32.mrb[0].mxu0
    %1219 = vmatprep.mubr.bf16.mxu0 %v1021
    %1220 = vmatmul.mubr.bf16.gmra.mrb[0].mxu0 %v916
    %v1221 = vpop.f32.mrb[0].mxu0
    %v1222 = vadd.f32 %v1065, %v1221
    %v1223 = vpop.f32.mrb[0].mxu0
    %v1224 = vpop.f32.mrb[0].mxu0
    %v1225 = vadd.f32 %v1065, %v1224
    %v1226 = vpop.f32.mrb[0].mxu0
    %1227 = vmatprep.mubr.bf16.mxu0 %v1022
    %1228 = vmatmul.mubr.bf16.gmra.mrb[0].mxu0 %v917
    %v1229 = vpop.f32.mrb[0].mxu0
    %v1230 = vadd.f32 %v1065, %v1229
    %v1231 = vpop.f32.mrb[0].mxu0
    %v1232 = vpop.f32.mrb[0].mxu0
    %v1233 = vadd.f32 %v1065, %v1232
    %v1234 = vpop.f32.mrb[0].mxu0
    %1235 = vmatprep.mubr.bf16.mxu0 %v1023
    %1236 = vmatmul.mubr.bf16.gmra.mrb[0].mxu0 %v918
    %v1237 = vpop.f32.mrb[0].mxu0
    %v1238 = vadd.f32 %v1065, %v1237
    %v1239 = vpop.f32.mrb[0].mxu0
    %v1240 = vpop.f32.mrb[0].mxu0
    %v1241 = vadd.f32 %v1065, %v1240
    %v1242 = vpop.f32.mrb[0].mxu0
    %1243 = vmatprep.mubr.bf16.mxu0 %v1024
    %1244 = vmatmul.mubr.bf16.gmra.mrb[0].mxu0 %v919
    %v1245 = vpop.f32.mrb[0].mxu0
    %v1246 = vadd.f32 %v1065, %v1245
    %v1247 = vpop.f32.mrb[0].mxu0
    %v1248 = vpop.f32.mrb[0].mxu0
    %v1249 = vadd.f32 %v1065, %v1248
    %v1250 = vpop.f32.mrb[0].mxu0
    %1251 = vmatprep.mubr.bf16.mxu0 %v1025
    %1252 = vmatmul.mubr.bf16.gmra.mrb[0].mxu0 %v920
    %v1253 = vpop.f32.mrb[0].mxu0
    %v1254 = vadd.f32 %v1065, %v1253
    %v1255 = vpop.f32.mrb[0].mxu0
    %v1256 = vpop.f32.mrb[0].mxu0
    %v1257 = vadd.f32 %v1065, %v1256
    %v1258 = vpop.f32.mrb[0].mxu0
    %1259 = vdwg.mxu0
    %v1260 = vmul.f32 %v1198, %v1198
    %v1261 = vmul.f32 %v1201, %v1201
    %v1262 = vmul.f32 %v1206, %v1206
    %v1263 = vmul.f32 %v1209, %v1209
    %v1264 = vmul.f32 %v1214, %v1214
    %v1265 = vmul.f32 %v1217, %v1217
    %v1266 = vmul.f32 %v1222, %v1222
    %v1267 = vmul.f32 %v1225, %v1225
    %v1268 = vmul.f32 %v1230, %v1230
    %v1269 = vmul.f32 %v1233, %v1233
    %v1270 = vmul.f32 %v1238, %v1238
    %v1271 = vmul.f32 %v1241, %v1241
    %v1272 = vmul.f32 %v1246, %v1246
    %v1273 = vmul.f32 %v1249, %v1249
    %v1274 = vmul.f32 %v1254, %v1254
    %v1275 = vmul.f32 %v1257, %v1257
    %1276 = vadd.xlane.f32.xlu0 %v1260
    %v1277 = vpop.xlane.xlu0 %1276
    %1278 = vadd.xlane.f32.xlu0 %v1261
    %v1279 = vpop.xlane.xlu0 %1278
    %1280 = vadd.xlane.f32.xlu0 %v1262
    %v1281 = vpop.xlane.xlu0 %1280
    %1282 = vadd.xlane.f32.xlu0 %v1263
    %v1283 = vpop.xlane.xlu0 %1282
    %1284 = vadd.xlane.f32.xlu0 %v1264
    %v1285 = vpop.xlane.xlu0 %1284
    %1286 = vadd.xlane.f32.xlu0 %v1265
    %v1287 = vpop.xlane.xlu0 %1286
    %1288 = vadd.xlane.f32.xlu0 %v1266
    %v1289 = vpop.xlane.xlu0 %1288
    %1290 = vadd.xlane.f32.xlu0 %v1267
    %v1291 = vpop.xlane.xlu0 %1290
    %1292 = vadd.xlane.f32.xlu0 %v1268
    %v1293 = vpop.xlane.xlu0 %1292
    %1294 = vadd.xlane.f32.xlu0 %v1269
    %v1295 = vpop.xlane.xlu0 %1294
    %1296 = vadd.xlane.f32.xlu0 %v1270
    %v1297 = vpop.xlane.xlu0 %1296
    %1298 = vadd.xlane.f32.xlu0 %v1271
    %v1299 = vpop.xlane.xlu0 %1298
    %1300 = vadd.xlane.f32.xlu0 %v1272
    %v1301 = vpop.xlane.xlu0 %1300
    %1302 = vadd.xlane.f32.xlu0 %v1273
    %v1303 = vpop.xlane.xlu0 %1302
    %1304 = vadd.xlane.f32.xlu0 %v1274
    %v1305 = vpop.xlane.xlu0 %1304
    %1306 = vadd.xlane.f32.xlu0 %v1275
    %v1307 = vpop.xlane.xlu0 %1306
    %v1308 = vmax.f32 %v1277, 1e-24
    %v1309 = vmax.f32 %v1279, 1e-24
    %v1310 = vmax.f32 %v1281, 1e-24
    %v1311 = vmax.f32 %v1283, 1e-24
    %v1312 = vmax.f32 %v1285, 1e-24
    %v1313 = vmax.f32 %v1287, 1e-24
    %v1314 = vmax.f32 %v1289, 1e-24
    %v1315 = vmax.f32 %v1291, 1e-24
    %v1316 = vmax.f32 %v1293, 1e-24
    %v1317 = vmax.f32 %v1295, 1e-24
    %v1318 = vmax.f32 %v1297, 1e-24
    %v1319 = vmax.f32 %v1299, 1e-24
    %v1320 = vmax.f32 %v1301, 1e-24
    %v1321 = vmax.f32 %v1303, 1e-24
    %v1322 = vmax.f32 %v1305, 1e-24
    %v1323 = vmax.f32 %v1307, 1e-24
    %v1324 = vrsqrt.pop %v1308
    %v1325 = vrsqrt.pop %v1309
    %v1326 = vrsqrt.pop %v1310
    %v1327 = vrsqrt.pop %v1311
    %v1328 = vrsqrt.pop %v1312
    %v1329 = vrsqrt.pop %v1313
    %v1330 = vrsqrt.pop %v1314
    %v1331 = vrsqrt.pop %v1315
    %v1332 = vrsqrt.pop %v1316
    %v1333 = vrsqrt.pop %v1317
    %v1334 = vrsqrt.pop %v1318
    %v1335 = vrsqrt.pop %v1319
    %v1336 = vrsqrt.pop %v1320
    %v1337 = vrsqrt.pop %v1321
    %v1338 = vrsqrt.pop %v1322
    %v1339 = vrsqrt.pop %v1323
    %v1340 = vmul.f32 %v1198, %v1324
    %v1341 = vmul.f32 %v1201, %v1325
    %v1342 = vmul.f32 %v1206, %v1326
    %v1343 = vmul.f32 %v1209, %v1327
    %v1344 = vmul.f32 %v1214, %v1328
    %v1345 = vmul.f32 %v1217, %v1329
    %v1346 = vmul.f32 %v1222, %v1330
    %v1347 = vmul.f32 %v1225, %v1331
    %v1348 = vmul.f32 %v1230, %v1332
    %v1349 = vmul.f32 %v1233, %v1333
    %v1350 = vmul.f32 %v1238, %v1334
    %v1351 = vmul.f32 %v1241, %v1335
    %v1352 = vmul.f32 %v1246, %v1336
    %v1353 = vmul.f32 %v1249, %v1337
    %v1354 = vmul.f32 %v1254, %v1338
    %v1355 = vmul.f32 %v1257, %v1339
    %v1356 = vmax.f32 %v1340, 0.0
    %v1357 = vmax.f32 %v1341, 0.0
    %v1358 = vmax.f32 %v1342, 0.0
    %v1359 = vmax.f32 %v1343, 0.0
    %v1360 = vmax.f32 %v1344, 0.0
    %v1361 = vmax.f32 %v1345, 0.0
    %v1362 = vmax.f32 %v1346, 0.0
    %v1363 = vmax.f32 %v1347, 0.0
    %v1364 = vmax.f32 %v1348, 0.0
    %v1365 = vmax.f32 %v1349, 0.0
    %v1366 = vmax.f32 %v1350, 0.0
    %v1367 = vmax.f32 %v1351, 0.0
    %v1368 = vmax.f32 %v1352, 0.0
    %v1369 = vmax.f32 %v1353, 0.0
    %v1370 = vmax.f32 %v1354, 0.0
    %v1371 = vmax.f32 %v1355, 0.0
    %s1372 = scalar_lea.vmem [#allocation13], 1
    %v1373 = vld [vmem:[%s1372] sm:$0x1]
    %v1375 = vlaneseq
    %v1376 = vshrl.u32 %v1375, 7
    %v1377 = vsub.s32 0, %v1376
    %v1378 = vrot.slane %v1373, %v1377
    %v1380 = vmul.f32 %v1356, %v1378
    %v1381 = vmul.f32 %v1357, %v1378
    %v1382 = vmul.f32 %v1358, %v1378
    %v1383 = vmul.f32 %v1359, %v1378
    %v1384 = vmul.f32 %v1360, %v1378
    %v1385 = vmul.f32 %v1361, %v1378
    %v1386 = vmul.f32 %v1362, %v1378
    %v1387 = vmul.f32 %v1363, %v1378
    %v1388 = vmul.f32 %v1364, %v1378
    %v1389 = vmul.f32 %v1365, %v1378
    %v1390 = vmul.f32 %v1366, %v1378
    %v1391 = vmul.f32 %v1367, %v1378
    %v1392 = vmul.f32 %v1368, %v1378
    %v1393 = vmul.f32 %v1369, %v1378
    %v1394 = vmul.f32 %v1370, %v1378
    %v1395 = vmul.f32 %v1371, %v1378
    %s1396 = scalar_lea.vmem [#allocation14], 1
    %v1397 = vld [vmem:[%s1396] sm:$0x1]
    %v1399 = vlaneseq
    %v1400 = vshrl.u32 %v1399, 7
    %v1401 = vsub.s32 0, %v1400
    %v1402 = vrot.slane %v1397, %v1401
    %v1404 = vadd.f32 %v1380, %v1402
    %v1405 = vadd.f32 %v1381, %v1402
    %v1406 = vadd.f32 %v1382, %v1402
    %v1407 = vadd.f32 %v1383, %v1402
    %v1408 = vadd.f32 %v1384, %v1402
    %v1409 = vadd.f32 %v1385, %v1402
    %v1410 = vadd.f32 %v1386, %v1402
    %v1411 = vadd.f32 %v1387, %v1402
    %v1412 = vadd.f32 %v1388, %v1402
    %v1413 = vadd.f32 %v1389, %v1402
    %v1414 = vadd.f32 %v1390, %v1402
    %v1415 = vadd.f32 %v1391, %v1402
    %v1416 = vadd.f32 %v1392, %v1402
    %v1417 = vadd.f32 %v1393, %v1402
    %v1418 = vadd.f32 %v1394, %v1402
    %v1419 = vadd.f32 %v1395, %v1402
    %v1420 = vadd.f32 %v1404, %v897
    %v1421 = vadd.f32 %v1405, %v898
    %v1422 = vadd.f32 %v1406, %v899
    %v1423 = vadd.f32 %v1407, %v900
    %v1424 = vadd.f32 %v1408, %v901
    %v1425 = vadd.f32 %v1409, %v902
    %v1426 = vadd.f32 %v1410, %v903
    %v1427 = vadd.f32 %v1411, %v904
    %v1428 = vadd.f32 %v1412, %v905
    %v1429 = vadd.f32 %v1413, %v906
    %v1430 = vadd.f32 %v1414, %v907
    %v1431 = vadd.f32 %v1415, %v908
    %v1432 = vadd.f32 %v1416, %v909
    %v1433 = vadd.f32 %v1417, %v910
    %v1434 = vadd.f32 %v1418, %v911
    %v1435 = vadd.f32 %v1419, %v912
    %v1436 = vpack.c.bf16 %v1421, %v1420
    %v1437 = vpack.c.bf16 %v1423, %v1422
    %v1438 = vpack.c.bf16 %v1425, %v1424
    %v1439 = vpack.c.bf16 %v1427, %v1426
    %v1440 = vpack.c.bf16 %v1429, %v1428
    %v1441 = vpack.c.bf16 %v1431, %v1430
    %v1442 = vpack.c.bf16 %v1433, %v1432
    %v1443 = vpack.c.bf16 %v1435, %v1434
    %1444 = vmatprep.subr.bf16.mxu0 0
    %1445 = vmatpush1.bf16.msra.mxu0 %v1436
    %1446 = vmatprep.subr.bf16.mxu0 0
    %1447 = vmatpush1.bf16.msra.mxu0 %v1437
    %1448 = vmatprep.subr.bf16.mxu0 0
    %1449 = vmatpush1.bf16.msra.mxu0 %v1438
    %1450 = vmatprep.subr.bf16.mxu0 0
    %1451 = vmatpush1.bf16.msra.mxu0 %v1439
    %1452 = vmatprep.subr.bf16.mxu0 0
    %1453 = vmatpush1.bf16.msra.mxu0 %v1440
    %1454 = vmatprep.subr.bf16.mxu0 0
    %1455 = vmatpush1.bf16.msra.mxu0 %v1441
    %1456 = vmatprep.subr.bf16.mxu0 0
    %1457 = vmatpush1.bf16.msra.mxu0 %v1442
    %1458 = vmatprep.subr.bf16.mxu0 0
    %1459 = vmatpush1.bf16.msra.mxu0 %v1443
    %1460 = vmatprep.subr.bf16.mxu0 0
    %1461 = vmatpush1.bf16.msra.mxu0 0
    %1462 = vmatprep.subr.bf16.mxu0 0
    %1463 = vmatpush1.bf16.msra.mxu0 0
    %1464 = vmatprep.subr.bf16.mxu0 0
    %1465 = vmatpush1.bf16.msra.mxu0 0
    %1466 = vmatprep.subr.bf16.mxu0 0
    %1467 = vmatpush1.bf16.msra.mxu0 0
    %1468 = vmatprep.subr.bf16.mxu0 0
    %1469 = vmatpush1.bf16.msra.mxu0 0
    %1470 = vmatprep.subr.bf16.mxu0 0
    %1471 = vmatpush1.bf16.msra.mxu0 0
    %1472 = vmatprep.subr.bf16.mxu0 0
    %1473 = vmatpush1.bf16.msra.mxu0 0
    %1474 = vmatprep.subr.bf16.mxu0 0
    %1475 = vmatpush1.bf16.msra.mxu0 0
    %1476 = vmatprep.mubr.bf16.mxu0 0
    %1477 = vmatmul.mubr.bf16.gmra.mrb[0].mxu0 %v386
    %v1478 = vpop.f32.mrb[0].mxu0
    %v1479 = vadd.f32 0.0, %v1478
    %v1480 = vpop.f32.mrb[0].mxu0
    %v1481 = vpop.f32.mrb[0].mxu0
    %v1482 = vadd.f32 0.0, %v1481
    %v1483 = vpop.f32.mrb[0].mxu0
    %1484 = vmatprep.mubr.bf16.mxu0 0
    %1485 = vmatmul.mubr.bf16.gmra.mrb[0].mxu0 %v387
    %v1486 = vpop.f32.mrb[0].mxu0
    %v1487 = vadd.f32 0.0, %v1486
    %v1488 = vpop.f32.mrb[0].mxu0
    %v1489 = vpop.f32.mrb[0].mxu0
    %v1490 = vadd.f32 0.0, %v1489
    %v1491 = vpop.f32.mrb[0].mxu0
    %1492 = vmatprep.mubr.bf16.mxu0 0
    %1493 = vmatmul.mubr.bf16.gmra.mrb[0].mxu0 %v388
    %v1494 = vpop.f32.mrb[0].mxu0
    %v1495 = vadd.f32 0.0, %v1494
    %v1496 = vpop.f32.mrb[0].mxu0
    %v1497 = vpop.f32.mrb[0].mxu0
    %v1498 = vadd.f32 0.0, %v1497
    %v1499 = vpop.f32.mrb[0].mxu0
    %1500 = vmatprep.mubr.bf16.mxu0 0
    %1501 = vmatmul.mubr.bf16.gmra.mrb[0].mxu0 %v389
    %v1502 = vpop.f32.mrb[0].mxu0
    %v1503 = vadd.f32 0.0, %v1502
    %v1504 = vpop.f32.mrb[0].mxu0
    %v1505 = vpop.f32.mrb[0].mxu0
    %v1506 = vadd.f32 0.0, %v1505
    %v1507 = vpop.f32.mrb[0].mxu0
    %1508 = vmatprep.mubr.bf16.mxu0 0
    %1509 = vmatmul.mubr.bf16.gmra.mrb[0].mxu0 %v390
    %v1510 = vpop.f32.mrb[0].mxu0
    %v1511 = vadd.f32 0.0, %v1510
    %v1512 = vpop.f32.mrb[0].mxu0
    %v1513 = vpop.f32.mrb[0].mxu0
    %v1514 = vadd.f32 0.0, %v1513
    %v1515 = vpop.f32.mrb[0].mxu0
    %1516 = vmatprep.mubr.bf16.mxu0 0
    %1517 = vmatmul.mubr.bf16.gmra.mrb[0].mxu0 %v391
    %v1518 = vpop.f32.mrb[0].mxu0
    %v1519 = vadd.f32 0.0, %v1518
    %v1520 = vpop.f32.mrb[0].mxu0
    %v1521 = vpop.f32.mrb[0].mxu0
    %v1522 = vadd.f32 0.0, %v1521
    %v1523 = vpop.f32.mrb[0].mxu0
    %1524 = vmatprep.mubr.bf16.mxu0 0
    %1525 = vmatmul.mubr.bf16.gmra.mrb[0].mxu0 %v392
    %v1526 = vpop.f32.mrb[0].mxu0
    %v1527 = vadd.f32 0.0, %v1526
    %v1528 = vpop.f32.mrb[0].mxu0
    %v1529 = vpop.f32.mrb[0].mxu0
    %v1530 = vadd.f32 0.0, %v1529
    %v1531 = vpop.f32.mrb[0].mxu0
    %1532 = vmatprep.mubr.bf16.mxu0 0
    %1533 = vmatmul.mubr.bf16.gmra.mrb[0].mxu0 %v393
    %v1534 = vpop.f32.mrb[0].mxu0
    %v1535 = vadd.f32 0.0, %v1534
    %v1536 = vpop.f32.mrb[0].mxu0
    %v1537 = vpop.f32.mrb[0].mxu0
    %v1538 = vadd.f32 0.0, %v1537
    %v1539 = vpop.f32.mrb[0].mxu0
    %1540 = vdwg.mxu0
    %v1541 = vpack.c.bf16 %v1482, %v1479
    %v1542 = vpack.c.bf16 %v1490, %v1487
    %v1543 = vpack.c.bf16 %v1498, %v1495
    %v1544 = vpack.c.bf16 %v1506, %v1503
    %v1545 = vpack.c.bf16 %v1514, %v1511
    %v1546 = vpack.c.bf16 %v1522, %v1519
    %v1547 = vpack.c.bf16 %v1530, %v1527
    %v1548 = vpack.c.bf16 %v1538, %v1535
    %s1549 = scalar_lea.vmem [#allocation10], 256
    %v1550 = vld [vmem:[%s1549] sm:$0xf]
    %v1551 = vld [vmem:[%s1549 + $0x4] sm:$0xf]
    %v1552 = vld [vmem:[%s1549 + $0x8] sm:$0xf]
    %v1553 = vld [vmem:[%s1549 + $0xc] sm:$0xf]
    %v1554 = vld [vmem:[%s1549 + $0x10] sm:$0xf]
    %v1555 = vld [vmem:[%s1549 + $0x14] sm:$0xf]
    %v1556 = vld [vmem:[%s1549 + $0x18] sm:$0xf]
    %v1557 = vld [vmem:[%s1549 + $0x1c] sm:$0xf]
    %v1558 = vld [vmem:[%s1549 + $0x20] sm:$0xf]
    %v1559 = vld [vmem:[%s1549 + $0x24] sm:$0xf]
    %v1560 = vld [vmem:[%s1549 + $0x28] sm:$0xf]
    %v1561 = vld [vmem:[%s1549 + $0x2c] sm:$0xf]
    %v1562 = vld [vmem:[%s1549 + $0x30] sm:$0xf]
    %v1563 = vld [vmem:[%s1549 + $0x34] sm:$0xf]
    %v1564 = vld [vmem:[%s1549 + $0x38] sm:$0xf]
    %v1565 = vld [vmem:[%s1549 + $0x3c] sm:$0xf]
    %v1566 = vld [vmem:[%s1549 + $0x40] sm:$0xf]
    %v1567 = vld [vmem:[%s1549 + $0x44] sm:$0xf]
    %v1568 = vld [vmem:[%s1549 + $0x48] sm:$0xf]
    %v1569 = vld [vmem:[%s1549 + $0x4c] sm:$0xf]
    %v1570 = vld [vmem:[%s1549 + $0x50] sm:$0xf]
    %v1571 = vld [vmem:[%s1549 + $0x54] sm:$0xf]
    %v1572 = vld [vmem:[%s1549 + $0x58] sm:$0xf]
    %v1573 = vld [vmem:[%s1549 + $0x5c] sm:$0xf]
    %v1574 = vld [vmem:[%s1549 + $0x60] sm:$0xf]
    %v1575 = vld [vmem:[%s1549 + $0x64] sm:$0xf]
    %v1576 = vld [vmem:[%s1549 + $0x68] sm:$0xf]
    %v1577 = vld [vmem:[%s1549 + $0x6c] sm:$0xf]
    %v1578 = vld [vmem:[%s1549 + $0x70] sm:$0xf]
    %v1579 = vld [vmem:[%s1549 + $0x74] sm:$0xf]
    %v1580 = vld [vmem:[%s1549 + $0x78] sm:$0xf]
    %v1581 = vld [vmem:[%s1549 + $0x7c] sm:$0xf]
    %s1582 = scalar_lea.vmem [#allocation11], 2
    %v1583 = vld [vmem:[%s1582] sm:$0x1]
    %v1585 = vlaneseq
    %v1586 = vshrl.u32 %v1585, 7
    %v1587 = vsub.s32 0, %v1586
    %v1588 = vrot.slane %v1583, %v1587
    %v1622 = vunpack.c.l.b16 %v1550
    %v1623 = vunpack.c.l.b16 %v1551
    %v1624 = vunpack.c.l.b16 %v1552
    %v1625 = vunpack.c.l.b16 %v1553
    %v1626 = vunpack.c.l.b16 %v1554
    %v1627 = vunpack.c.l.b16 %v1555
    %v1628 = vunpack.c.l.b16 %v1556
    %v1629 = vunpack.c.l.b16 %v1557
    %v1630 = vunpack.c.l.b16 %v1558
    %v1631 = vunpack.c.l.b16 %v1559
    %v1632 = vunpack.c.l.b16 %v1560
    %v1633 = vunpack.c.l.b16 %v1561
    %v1634 = vunpack.c.l.b16 %v1562
    %v1635 = vunpack.c.l.b16 %v1563
    %v1636 = vunpack.c.l.b16 %v1564
    %v1637 = vunpack.c.l.b16 %v1565
    %v1638 = vunpack.c.l.b16 %v1566
    %v1639 = vunpack.c.l.b16 %v1567
    %v1640 = vunpack.c.l.b16 %v1568
    %v1641 = vunpack.c.l.b16 %v1569
    %v1642 = vunpack.c.l.b16 %v1570
    %v1643 = vunpack.c.l.b16 %v1571
    %v1644 = vunpack.c.l.b16 %v1572
    %v1645 = vunpack.c.l.b16 %v1573
    %v1646 = vunpack.c.l.b16 %v1574
    %v1647 = vunpack.c.l.b16 %v1575
    %v1648 = vunpack.c.l.b16 %v1576
    %v1649 = vunpack.c.l.b16 %v1577
    %v1650 = vunpack.c.l.b16 %v1578
    %v1651 = vunpack.c.l.b16 %v1579
    %v1652 = vunpack.c.l.b16 %v1580
    %v1653 = vunpack.c.l.b16 %v1581
    %v1654 = vpack.c.b16 %v1623, %v1622
    %v1655 = vpack.c.b16 %v1625, %v1624
    %v1656 = vpack.c.b16 %v1627, %v1626
    %v1657 = vpack.c.b16 %v1629, %v1628
    %v1658 = vpack.c.b16 %v1631, %v1630
    %v1659 = vpack.c.b16 %v1633, %v1632
    %v1660 = vpack.c.b16 %v1635, %v1634
    %v1661 = vpack.c.b16 %v1637, %v1636
    %v1662 = vpack.c.b16 %v1639, %v1638
    %v1663 = vpack.c.b16 %v1641, %v1640
    %v1664 = vpack.c.b16 %v1643, %v1642
    %v1665 = vpack.c.b16 %v1645, %v1644
    %v1666 = vpack.c.b16 %v1647, %v1646
    %v1667 = vpack.c.b16 %v1649, %v1648
    %v1668 = vpack.c.b16 %v1651, %v1650
    %v1669 = vpack.c.b16 %v1653, %v1652
    %1686 = vmatprep.subr.bf16.mxu0 0
    %1687 = vmatpush1.bf16.msra.mxu0 %v1654
    %1688 = vmatprep.subr.bf16.mxu0 0
    %1689 = vmatpush1.bf16.msra.mxu0 %v1655
    %1690 = vmatprep.subr.bf16.mxu0 0
    %1691 = vmatpush1.bf16.msra.mxu0 %v1656
    %1692 = vmatprep.subr.bf16.mxu0 0
    %1693 = vmatpush1.bf16.msra.mxu0 %v1657
    %1694 = vmatprep.subr.bf16.mxu0 0
    %1695 = vmatpush1.bf16.msra.mxu0 %v1658
    %1696 = vmatprep.subr.bf16.mxu0 0
    %1697 = vmatpush1.bf16.msra.mxu0 %v1659
    %1698 = vmatprep.subr.bf16.mxu0 0
    %1699 = vmatpush1.bf16.msra.mxu0 %v1660
    %1700 = vmatprep.subr.bf16.mxu0 0
    %1701 = vmatpush1.bf16.msra.mxu0 %v1661
    %1702 = vmatprep.subr.bf16.mxu0 0
    %1703 = vmatpush1.bf16.msra.mxu0 %v1662
    %1704 = vmatprep.subr.bf16.mxu0 0
    %1705 = vmatpush1.bf16.msra.mxu0 %v1663
    %1706 = vmatprep.subr.bf16.mxu0 0
    %1707 = vmatpush1.bf16.msra.mxu0 %v1664
    %1708 = vmatprep.subr.bf16.mxu0 0
    %1709 = vmatpush1.bf16.msra.mxu0 %v1665
    %1710 = vmatprep.subr.bf16.mxu0 0
    %1711 = vmatpush1.bf16.msra.mxu0 %v1666
    %1712 = vmatprep.subr.bf16.mxu0 0
    %1713 = vmatpush1.bf16.msra.mxu0 %v1667
    %1714 = vmatprep.subr.bf16.mxu0 0
    %1715 = vmatpush1.bf16.msra.mxu0 %v1668
    %1716 = vmatprep.subr.bf16.mxu0 0
    %1717 = vmatpush1.bf16.msra.mxu0 %v1669
    %1718 = vmatprep.mubr.bf16.mxu0 %v1541
    %1719 = vmatmul.mubr.bf16.gmra.mrb[0].mxu0 %v1436
    %v1720 = vpop.f32.mrb[0].mxu0
    %v1721 = vadd.f32 %v1588, %v1720
    %v1722 = vpop.f32.mrb[0].mxu0
    %v1723 = vpop.f32.mrb[0].mxu0
    %v1724 = vadd.f32 %v1588, %v1723
    %v1725 = vpop.f32.mrb[0].mxu0
    %1726 = vmatprep.mubr.bf16.mxu0 %v1542
    %1727 = vmatmul.mubr.bf16.gmra.mrb[0].mxu0 %v1437
    %v1728 = vpop.f32.mrb[0].mxu0
    %v1729 = vadd.f32 %v1588, %v1728
    %v1730 = vpop.f32.mrb[0].mxu0
    %v1731 = vpop.f32.mrb[0].mxu0
    %v1732 = vadd.f32 %v1588, %v1731
    %v1733 = vpop.f32.mrb[0].mxu0
    %1734 = vmatprep.mubr.bf16.mxu0 %v1543
    %1735 = vmatmul.mubr.bf16.gmra.mrb[0].mxu0 %v1438
    %v1736 = vpop.f32.mrb[0].mxu0
    %v1737 = vadd.f32 %v1588, %v1736
    %v1738 = vpop.f32.mrb[0].mxu0
    %v1739 = vpop.f32.mrb[0].mxu0
    %v1740 = vadd.f32 %v1588, %v1739
    %v1741 = vpop.f32.mrb[0].mxu0
    %1742 = vmatprep.mubr.bf16.mxu0 %v1544
    %1743 = vmatmul.mubr.bf16.gmra.mrb[0].mxu0 %v1439
    %v1744 = vpop.f32.mrb[0].mxu0
    %v1745 = vadd.f32 %v1588, %v1744
    %v1746 = vpop.f32.mrb[0].mxu0
    %v1747 = vpop.f32.mrb[0].mxu0
    %v1748 = vadd.f32 %v1588, %v1747
    %v1749 = vpop.f32.mrb[0].mxu0
    %1750 = vmatprep.mubr.bf16.mxu0 %v1545
    %1751 = vmatmul.mubr.bf16.gmra.mrb[0].mxu0 %v1440
    %v1752 = vpop.f32.mrb[0].mxu0
    %v1753 = vadd.f32 %v1588, %v1752
    %v1754 = vpop.f32.mrb[0].mxu0
    %v1755 = vpop.f32.mrb[0].mxu0
    %v1756 = vadd.f32 %v1588, %v1755
    %v1757 = vpop.f32.mrb[0].mxu0
    %1758 = vmatprep.mubr.bf16.mxu0 %v1546
    %1759 = vmatmul.mubr.bf16.gmra.mrb[0].mxu0 %v1441
    %v1760 = vpop.f32.mrb[0].mxu0
    %v1761 = vadd.f32 %v1588, %v1760
    %v1762 = vpop.f32.mrb[0].mxu0
    %v1763 = vpop.f32.mrb[0].mxu0
    %v1764 = vadd.f32 %v1588, %v1763
    %v1765 = vpop.f32.mrb[0].mxu0
    %1766 = vmatprep.mubr.bf16.mxu0 %v1547
    %1767 = vmatmul.mubr.bf16.gmra.mrb[0].mxu0 %v1442
    %v1768 = vpop.f32.mrb[0].mxu0
    %v1769 = vadd.f32 %v1588, %v1768
    %v1770 = vpop.f32.mrb[0].mxu0
    %v1771 = vpop.f32.mrb[0].mxu0
    %v1772 = vadd.f32 %v1588, %v1771
    %v1773 = vpop.f32.mrb[0].mxu0
    %1774 = vmatprep.mubr.bf16.mxu0 %v1548
    %1775 = vmatmul.mubr.bf16.gmra.mrb[0].mxu0 %v1443
    %v1776 = vpop.f32.mrb[0].mxu0
    %v1777 = vadd.f32 %v1588, %v1776
    %v1778 = vpop.f32.mrb[0].mxu0
    %v1779 = vpop.f32.mrb[0].mxu0
    %v1780 = vadd.f32 %v1588, %v1779
    %v1781 = vpop.f32.mrb[0].mxu0
    %1782 = vdwg.mxu0
    %v1783 = vmul.f32 %v1721, %v1721
    %v1784 = vmul.f32 %v1724, %v1724
    %v1785 = vmul.f32 %v1729, %v1729
    %v1786 = vmul.f32 %v1732, %v1732
    %v1787 = vmul.f32 %v1737, %v1737
    %v1788 = vmul.f32 %v1740, %v1740
    %v1789 = vmul.f32 %v1745, %v1745
    %v1790 = vmul.f32 %v1748, %v1748
    %v1791 = vmul.f32 %v1753, %v1753
    %v1792 = vmul.f32 %v1756, %v1756
    %v1793 = vmul.f32 %v1761, %v1761
    %v1794 = vmul.f32 %v1764, %v1764
    %v1795 = vmul.f32 %v1769, %v1769
    %v1796 = vmul.f32 %v1772, %v1772
    %v1797 = vmul.f32 %v1777, %v1777
    %v1798 = vmul.f32 %v1780, %v1780
    %1799 = vadd.xlane.f32.xlu0 %v1783
    %v1800 = vpop.xlane.xlu0 %1799
    %1801 = vadd.xlane.f32.xlu0 %v1784
    %v1802 = vpop.xlane.xlu0 %1801
    %1803 = vadd.xlane.f32.xlu0 %v1785
    %v1804 = vpop.xlane.xlu0 %1803
    %1805 = vadd.xlane.f32.xlu0 %v1786
    %v1806 = vpop.xlane.xlu0 %1805
    %1807 = vadd.xlane.f32.xlu0 %v1787
    %v1808 = vpop.xlane.xlu0 %1807
    %1809 = vadd.xlane.f32.xlu0 %v1788
    %v1810 = vpop.xlane.xlu0 %1809
    %1811 = vadd.xlane.f32.xlu0 %v1789
    %v1812 = vpop.xlane.xlu0 %1811
    %1813 = vadd.xlane.f32.xlu0 %v1790
    %v1814 = vpop.xlane.xlu0 %1813
    %1815 = vadd.xlane.f32.xlu0 %v1791
    %v1816 = vpop.xlane.xlu0 %1815
    %1817 = vadd.xlane.f32.xlu0 %v1792
    %v1818 = vpop.xlane.xlu0 %1817
    %1819 = vadd.xlane.f32.xlu0 %v1793
    %v1820 = vpop.xlane.xlu0 %1819
    %1821 = vadd.xlane.f32.xlu0 %v1794
    %v1822 = vpop.xlane.xlu0 %1821
    %1823 = vadd.xlane.f32.xlu0 %v1795
    %v1824 = vpop.xlane.xlu0 %1823
    %1825 = vadd.xlane.f32.xlu0 %v1796
    %v1826 = vpop.xlane.xlu0 %1825
    %1827 = vadd.xlane.f32.xlu0 %v1797
    %v1828 = vpop.xlane.xlu0 %1827
    %1829 = vadd.xlane.f32.xlu0 %v1798
    %v1830 = vpop.xlane.xlu0 %1829
    %v1831 = vmax.f32 %v1800, 1e-24
    %v1832 = vmax.f32 %v1802, 1e-24
    %v1833 = vmax.f32 %v1804, 1e-24
    %v1834 = vmax.f32 %v1806, 1e-24
    %v1835 = vmax.f32 %v1808, 1e-24
    %v1836 = vmax.f32 %v1810, 1e-24
    %v1837 = vmax.f32 %v1812, 1e-24
    %v1838 = vmax.f32 %v1814, 1e-24
    %v1839 = vmax.f32 %v1816, 1e-24
    %v1840 = vmax.f32 %v1818, 1e-24
    %v1841 = vmax.f32 %v1820, 1e-24
    %v1842 = vmax.f32 %v1822, 1e-24
    %v1843 = vmax.f32 %v1824, 1e-24
    %v1844 = vmax.f32 %v1826, 1e-24
    %v1845 = vmax.f32 %v1828, 1e-24
    %v1846 = vmax.f32 %v1830, 1e-24
    %v1847 = vrsqrt.pop %v1831
    %v1848 = vrsqrt.pop %v1832
    %v1849 = vrsqrt.pop %v1833
    %v1850 = vrsqrt.pop %v1834
    %v1851 = vrsqrt.pop %v1835
    %v1852 = vrsqrt.pop %v1836
    %v1853 = vrsqrt.pop %v1837
    %v1854 = vrsqrt.pop %v1838
    %v1855 = vrsqrt.pop %v1839
    %v1856 = vrsqrt.pop %v1840
    %v1857 = vrsqrt.pop %v1841
    %v1858 = vrsqrt.pop %v1842
    %v1859 = vrsqrt.pop %v1843
    %v1860 = vrsqrt.pop %v1844
    %v1861 = vrsqrt.pop %v1845
    %v1862 = vrsqrt.pop %v1846
    %v1863 = vmul.f32 %v1721, %v1847
    %v1864 = vmul.f32 %v1724, %v1848
    %v1865 = vmul.f32 %v1729, %v1849
    %v1866 = vmul.f32 %v1732, %v1850
    %v1867 = vmul.f32 %v1737, %v1851
    %v1868 = vmul.f32 %v1740, %v1852
    %v1869 = vmul.f32 %v1745, %v1853
    %v1870 = vmul.f32 %v1748, %v1854
    %v1871 = vmul.f32 %v1753, %v1855
    %v1872 = vmul.f32 %v1756, %v1856
    %v1873 = vmul.f32 %v1761, %v1857
    %v1874 = vmul.f32 %v1764, %v1858
    %v1875 = vmul.f32 %v1769, %v1859
    %v1876 = vmul.f32 %v1772, %v1860
    %v1877 = vmul.f32 %v1777, %v1861
    %v1878 = vmul.f32 %v1780, %v1862
    %v1879 = vmax.f32 %v1863, 0.0
    %v1880 = vmax.f32 %v1864, 0.0
    %v1881 = vmax.f32 %v1865, 0.0
    %v1882 = vmax.f32 %v1866, 0.0
    %v1883 = vmax.f32 %v1867, 0.0
    %v1884 = vmax.f32 %v1868, 0.0
    %v1885 = vmax.f32 %v1869, 0.0
    %v1886 = vmax.f32 %v1870, 0.0
    %v1887 = vmax.f32 %v1871, 0.0
    %v1888 = vmax.f32 %v1872, 0.0
    %v1889 = vmax.f32 %v1873, 0.0
    %v1890 = vmax.f32 %v1874, 0.0
    %v1891 = vmax.f32 %v1875, 0.0
    %v1892 = vmax.f32 %v1876, 0.0
    %v1893 = vmax.f32 %v1877, 0.0
    %v1894 = vmax.f32 %v1878, 0.0
    %s1895 = scalar_lea.vmem [#allocation13], 2
    %v1896 = vld [vmem:[%s1895] sm:$0x1]
    %v1898 = vlaneseq
    %v1899 = vshrl.u32 %v1898, 7
    %v1900 = vsub.s32 0, %v1899
    %v1901 = vrot.slane %v1896, %v1900
    %v1903 = vmul.f32 %v1879, %v1901
    %v1904 = vmul.f32 %v1880, %v1901
    %v1905 = vmul.f32 %v1881, %v1901
    %v1906 = vmul.f32 %v1882, %v1901
    %v1907 = vmul.f32 %v1883, %v1901
    %v1908 = vmul.f32 %v1884, %v1901
    %v1909 = vmul.f32 %v1885, %v1901
    %v1910 = vmul.f32 %v1886, %v1901
    %v1911 = vmul.f32 %v1887, %v1901
    %v1912 = vmul.f32 %v1888, %v1901
    %v1913 = vmul.f32 %v1889, %v1901
    %v1914 = vmul.f32 %v1890, %v1901
    %v1915 = vmul.f32 %v1891, %v1901
    %v1916 = vmul.f32 %v1892, %v1901
    %v1917 = vmul.f32 %v1893, %v1901
    %v1918 = vmul.f32 %v1894, %v1901
    %s1919 = scalar_lea.vmem [#allocation14], 2
    %v1920 = vld [vmem:[%s1919] sm:$0x1]
    %v1922 = vlaneseq
    %v1923 = vshrl.u32 %v1922, 7
    %v1924 = vsub.s32 0, %v1923
    %v1925 = vrot.slane %v1920, %v1924
    %v1927 = vadd.f32 %v1903, %v1925
    %v1928 = vadd.f32 %v1904, %v1925
    %v1929 = vadd.f32 %v1905, %v1925
    %v1930 = vadd.f32 %v1906, %v1925
    %v1931 = vadd.f32 %v1907, %v1925
    %v1932 = vadd.f32 %v1908, %v1925
    %v1933 = vadd.f32 %v1909, %v1925
    %v1934 = vadd.f32 %v1910, %v1925
    %v1935 = vadd.f32 %v1911, %v1925
    %v1936 = vadd.f32 %v1912, %v1925
    %v1937 = vadd.f32 %v1913, %v1925
    %v1938 = vadd.f32 %v1914, %v1925
    %v1939 = vadd.f32 %v1915, %v1925
    %v1940 = vadd.f32 %v1916, %v1925
    %v1941 = vadd.f32 %v1917, %v1925
    %v1942 = vadd.f32 %v1918, %v1925
    %v1943 = vadd.f32 %v1927, %v1420
    %v1944 = vadd.f32 %v1928, %v1421
    %v1945 = vadd.f32 %v1929, %v1422
    %v1946 = vadd.f32 %v1930, %v1423
    %v1947 = vadd.f32 %v1931, %v1424
    %v1948 = vadd.f32 %v1932, %v1425
    %v1949 = vadd.f32 %v1933, %v1426
    %v1950 = vadd.f32 %v1934, %v1427
    %v1951 = vadd.f32 %v1935, %v1428
    %v1952 = vadd.f32 %v1936, %v1429
    %v1953 = vadd.f32 %v1937, %v1430
    %v1954 = vadd.f32 %v1938, %v1431
    %v1955 = vadd.f32 %v1939, %v1432
    %v1956 = vadd.f32 %v1940, %v1433
    %v1957 = vadd.f32 %v1941, %v1434
    %v1958 = vadd.f32 %v1942, %v1435
    %1959 = vst [vmem:[#allocation16] sm:$0xff] %v1943
    %1960 = vst [vmem:[#allocation16 + $0x8] sm:$0xff] %v1944
    %1961 = vst [vmem:[#allocation16 + $0x10] sm:$0xff] %v1945
    %1962 = vst [vmem:[#allocation16 + $0x18] sm:$0xff] %v1946
    %1963 = vst [vmem:[#allocation16 + $0x20] sm:$0xff] %v1947
    %1964 = vst [vmem:[#allocation16 + $0x28] sm:$0xff] %v1948
    %1965 = vst [vmem:[#allocation16 + $0x30] sm:$0xff] %v1949
    %1966 = vst [vmem:[#allocation16 + $0x38] sm:$0xff] %v1950
    %1967 = vst [vmem:[#allocation16 + $0x40] sm:$0xff] %v1951
    %1968 = vst [vmem:[#allocation16 + $0x48] sm:$0xff] %v1952
    %1969 = vst [vmem:[#allocation16 + $0x50] sm:$0xff] %v1953
    %1970 = vst [vmem:[#allocation16 + $0x58] sm:$0xff] %v1954
    %1971 = vst [vmem:[#allocation16 + $0x60] sm:$0xff] %v1955
    %1972 = vst [vmem:[#allocation16 + $0x68] sm:$0xff] %v1956
    %1973 = vst [vmem:[#allocation16 + $0x70] sm:$0xff] %v1957
    %1974 = vst [vmem:[#allocation16 + $0x78] sm:$0xff] %v1958
    // Predicated region
    $region66: #{tpu_custom_call.1} parent=1 // pred_check
      _
    $region67: #{tpu_custom_call.1} parent=1 // pred_check_branch
      %1976 = sbr.rel (0) target = $region69
    $region68: #{tpu_custom_call.1} parent=1 // pred_region
      %s1978 = ssub.s32 2048, 2048
      %1979 = vsyncadd [#allocation4], %s1978
      %s1980 = sshll.u32 [#allocation16], 4
      %s1981 = int_to_ptr.vmem [resolvable:$true] %s1980
      %1986 = dma.vmem_to_hbm [thread:$0]  %s1981, 2048, %s8, [#allocation4], 128, 128, 8
    $region69: #{tpu_custom_call.1} parent=1 // pred_fallthru
      _
    // Predicated region
    $region70: #{tpu_custom_call.1} parent=1 // pred_check
      _
    $region71: #{tpu_custom_call.1} parent=1 // pred_check_branch
      %1988 = sbr.rel (0) target = $region73
    $region72: #{tpu_custom_call.1} parent=1 // pred_region
      %1989 = dma.done [#allocation4], 2048
    $region73: #{tpu_custom_call.1} parent=1 // pred_fallthru
      _
    %1990 = vsyncpa [#allocation3], 1
    %1991 = vsyncpa [#allocation6], 1
    %1992 = vsyncpa [#allocation9], 1
    %1993 = vsyncpa [#allocation12], 1
    %1994 = vsyncpa [#allocation15], 1
    %1995 = vsyncpa [#allocation4], 1

</llo_original>
